<compile_context>
chip_gen: v5e
topology: v5e:2x2
jax: 0.10.0
libtpu: 0.0.40
codegen_flags: <defaults>
</compile_context>

<pallas_src>
import numpy as np
import jax
import jax.numpy as jnp
from jax import lax
from jax.experimental import pallas as pl
from jax.experimental.pallas import tpu as pltpu


_NK_CHUNK = 256      # tile of the known-patch (reduction) axis
_HW_TILE_MAX = 512   # tile of the query (hw) axis


def _round_up(x, m):
    return (x + m - 1) // m * m


# ---------------------------------------------------------------------------
# Kernel A: normalized cross-correlation + online (single pass) max / argmax
#   sim[k, q] = <x[:, q], known[k, :] / ||known[k]||>
#   grid = (bz, hw_tiles, nk_chunks); running max in VMEM scratch, running
#   argmax in the resident int32 output block, merged per nk-chunk.
# ---------------------------------------------------------------------------
def make_sim_argmax_kernel(n_known, chunk):
    def kernel(known_ref, x_ref, ind_ref, vmax_sc):
        ci = pl.program_id(2)

        # L2 normalization folded into the matmul LHS: chunk*c multiplies,
        # rsqrt on the EUP (free slot alongside MXU work).
        kf = known_ref[...].astype(jnp.float32)                     # (chunk, c)
        inv_norm = lax.rsqrt(jnp.sum(kf * kf, axis=1, keepdims=True) + 1e-16)
        kn = (kf * inv_norm).astype(jnp.bfloat16)

        # bf16 MXU matmul, f32 accumulation; contract the channel axis.
        sim = lax.dot_general(kn, x_ref[...], (((1,), (0,)), ((), ())),
                              preferred_element_type=jnp.float32)   # (chunk, hwt)

        grow = lax.broadcasted_iota(jnp.int32, sim.shape, 0) + ci * chunk
        valid = grow < n_known
        simm = jnp.where(valid, sim, float("-inf"))
        cmax = jnp.max(simm, axis=0, keepdims=True)                 # (1, hwt)
        cand = jnp.where(simm >= cmax, grow, 2 ** 30)               # invalid rows are -inf
        carg = jnp.min(cand, axis=0, keepdims=True)                 # first argmax

        @pl.when(ci == 0)
        def _():
            vmax_sc[...] = cmax
            ind_ref[...] = carg

        @pl.when(ci > 0)
        def _():
            prev_max = vmax_sc[...]
            take = cmax > prev_max
            vmax_sc[...] = jnp.where(take, cmax, prev_max)
            ind_ref[...] = jnp.where(take, carg, ind_ref[...])

    return kernel


def sim_argmax(known_bf, x_bf, n_known):
    bz, nk_pad, c = known_bf.shape
    _, _, hw_pad = x_bf.shape
    chunk = min(_NK_CHUNK, nk_pad)
    n_chunks = nk_pad // chunk
    hw_tile = _HW_TILE_MAX
    while hw_pad % hw_tile:
        hw_tile //= 2                       # hw_pad is a multiple of 128
    n_q = hw_pad // hw_tile

    kernel = make_sim_argmax_kernel(n_known, chunk)
    ind = pl.pallas_call(
        kernel,
        out_shape=jax.ShapeDtypeStruct((bz, 1, hw_pad), jnp.int32),
        grid=(bz, n_q, n_chunks),
        in_specs=[pl.BlockSpec((None, chunk, c), lambda b, q, k: (b, k, 0)),
                  pl.BlockSpec((None, c, hw_tile), lambda b, q, k: (b, 0, q))],
        out_specs=pl.BlockSpec((None, 1, hw_tile), lambda b, q, k: (b, 0, q)),
        scratch_shapes=[pltpu.VMEM((1, hw_tile), jnp.float32)],
        compiler_params=pltpu.CompilerParams(
            dimension_semantics=("parallel", "parallel", "arbitrary")),
    )(known_bf, x_bf)
    return ind[:, 0, :]                                             # (bz, hw_pad) int32


# ---------------------------------------------------------------------------
# Kernel B: sequential attention-refinement over masked positions (on-chip)
#   out[t] = a_new * out[t-1] + a_ori * known_sel[t]
#   Known rows are pre-gathered with the argmax indices in the wrapper, so the
#   kernel only sees (nm_pad, c) slabs.  Prev-independent work is a vectorized
#   prologue; the serial loop carries `prev` in vregs.
# ---------------------------------------------------------------------------
def make_refine_kernel(n_mask):
    def kernel(ksel_ref, unk_ref, out_ref, uhat_sc, vmax_sc):
        # vectorized prologue: u_hat and vmax_t for every step at once
        u = unk_ref[...]                                            # (nm_pad, c)
        k = ksel_ref[...]                                           # (nm_pad, c)
        u_inv = 1.0 / (jnp.sqrt(jnp.sum(u * u, axis=1, keepdims=True)) + 1e-8)
        k_inv = 1.0 / (jnp.sqrt(jnp.sum(k * k, axis=1, keepdims=True)) + 1e-8)
        uhat_sc[...] = u * u_inv
        vmax_sc[...] = jnp.sum(u * k, axis=1, keepdims=True) * k_inv

        # t = 0: copy the best-matching known patch
        prev0 = ksel_ref[pl.ds(0, 1), :]                            # (1, c)
        out_ref[pl.ds(0, 1), :] = prev0

        def body(t, prev):
            uh = uhat_sc[pl.ds(t, 1), :]                            # (1, c)
            kr = ksel_ref[pl.ds(t, 1), :]                           # (1, c)
            vm = vmax_sc[pl.ds(t, 1), :]                            # (1, 1)
            at = jnp.sum(prev * uh, axis=1, keepdims=True)          # (1, 1)
            denom = at + vm
            # sign-preserving guard (original has no guard -> Inf/NaN risk)
            denom = jnp.where(jnp.abs(denom) < 1e-8,
                              jnp.where(denom < 0.0, -1e-8, 1e-8), denom)
            inv = pl.reciprocal(denom, approx=True)
            new = (at * inv) * prev + (vm * inv) * kr               # (1, c)
            out_ref[pl.ds(t, 1), :] = new
            return new

        lax.fori_loop(1, n_mask, body, prev0)

    return kernel


def attention_refine(ksel_pad, unk_pad, n_mask):
    bz, nm_pad, c = unk_pad.shape
    kernel = make_refine_kernel(n_mask)
    return pl.pallas_call(
        kernel,
        out_shape=jax.ShapeDtypeStruct((bz, nm_pad, c), jnp.float32),
        grid=(bz,),
        in_specs=[pl.BlockSpec((None, nm_pad, c), lambda b: (b, 0, 0)),
                  pl.BlockSpec((None, nm_pad, c), lambda b: (b, 0, 0))],
        out_specs=pl.BlockSpec((None, nm_pad, c), lambda b: (b, 0, 0)),
        scratch_shapes=[pltpu.VMEM((nm_pad, c), jnp.float32),
                        pltpu.VMEM((nm_pad, 1), jnp.float32)],
        compiler_params=pltpu.CompilerParams(dimension_semantics=("parallel",)),
    )(ksel_pad, unk_pad)


# ---------------------------------------------------------------------------
# Full AECR forward (shift_sz = stride = mask_thred = 1)
# ---------------------------------------------------------------------------
def aecr_forward(x, mask2d):
    x = x.astype(jnp.float32)
    bz, c, h, w = x.shape
    hw = h * w

    # mask bookkeeping (util.cal_mask_given_mask_thred equivalent, 1x1 patches)
    flag = np.asarray(mask2d, np.bool_).reshape(-1)
    assert flag.shape[0] == hw
    mask_idx_np = np.where(flag)[0].astype(np.int32)          # mask_point_idx
    nonmask_idx_np = np.where(~flag)[0].astype(np.int32)      # nonmask_point_idx
    nm = int(mask_idx_np.shape[0])
    nk = int(nonmask_idx_np.shape[0])
    assert nm >= 1 and nk >= 1

    chunk = min(_NK_CHUNK, _round_up(nk, 8))
    nk_pad = _round_up(nk, chunk)
    nm_pad = _round_up(nm, 8)
    hw_pad = _round_up(hw, 128)

    nonmask_idx = jnp.asarray(nonmask_idx_np)
    mask_idx = jnp.asarray(mask_idx_np)

    xf = x.reshape(bz, c, hw)                                  # (bz, c, hw)
    known_cols = jnp.take(xf, nonmask_idx, axis=2)             # (bz, c, nk)
    known_rows = jnp.transpose(known_cols, (0, 2, 1))          # (bz, nk, c)
    unk_rows = jnp.transpose(jnp.take(xf, mask_idx, axis=2), (0, 2, 1))   # (bz, nm, c)

    # Kernel A operands: bf16 (f32 accumulation in-kernel)
    known_bf = jnp.pad(known_rows,
                       ((0, 0), (0, nk_pad - nk), (0, 0))).astype(jnp.bfloat16)
    x_bf = xf.astype(jnp.bfloat16)
    if hw_pad > hw:
        x_bf = jnp.pad(x_bf, ((0, 0), (0, 0), (0, hw_pad - hw)))

    # Kernel A: best-matching known patch per position (Pospara.update_output)
    ind_full = sim_argmax(known_bf, x_bf, nk)[:, :hw]          # (bz, hw) int32

    # Kernel B operands: only the nm known rows actually referenced (gathered),
    # not the whole known slab -> ~nk/nm less HBM->VMEM traffic and VMEM footprint.
    ind_mask = jnp.take(ind_full, mask_idx, axis=1)            # (bz, nm)
    ksel = jnp.take_along_axis(
        known_rows, jnp.broadcast_to(ind_mask[:, :, None], (bz, nm, c)), axis=1)
    ksel_pad = jnp.pad(ksel, ((0, 0), (0, nm_pad - nm), (0, 0)))
    unk_pad = jnp.pad(unk_rows, ((0, 0), (0, nm_pad - nm), (0, 0)))

    # Kernel B: sequential refinement for masked positions
    out_mask_rows = attention_refine(ksel_pad, unk_pad, nm)[:, :nm, :]
    out_mask = jnp.transpose(out_mask_rows, (0, 2, 1))         # (bz, c, nm)

    # non-masked positions: copy the best-matching known patch (pure gather)
    ind_nonmask = jnp.take(ind_full, nonmask_idx, axis=1)      # (bz, nk)
    out_nonmask = jnp.take_along_axis(
        known_cols, jnp.broadcast_to(ind_nonmask[:, None, :], (bz, c, nk)), axis=2)

    # stitch back with a static permutation gather (no dense scatter / no hw x hw)
    combined = jnp.concatenate([out_nonmask, out_mask], axis=2)     # (bz, c, hw)
    perm = np.argsort(np.concatenate([nonmask_idx_np, mask_idx_np])).astype(np.int32)
    out_f = jnp.take(combined, jnp.asarray(perm), axis=2)
    return out_f.reshape(bz, c, h, w)


if __name__ == "__main__":
    key = jax.random.PRNGKey(0)
    bz, c, h, w = 2, 32, 16, 16
    x = jax.random.normal(key, (bz, c, h, w), dtype=jnp.float32)

    # deterministic mask: 3x3 hole
    mask2d = np.zeros((h, w), np.bool_)
    mask2d[5:8, 6:9] = True

    fwd = jax.jit(lambda inp: aecr_forward(inp, mask2d))
    out = jax.block_until_ready(fwd(x))

    assert out.shape == (bz, c, h, w)
    assert bool(jnp.all(jnp.isfinite(out)))
    print("KERNEL_OK")
</pallas_src>

<mosaic_0001>
module attributes {stable_mosaic.version = 11 : i64} {
  func.func @kernel(%arg0: i32, %arg1: i32, %arg2: i32, %arg3: memref<1x248x32xbf16, #tpu.memory_space<vmem>>, %arg4: memref<1x32x256xbf16, #tpu.memory_space<vmem>>, %arg5: memref<1x1x256xi32, #tpu.memory_space<vmem>>, %arg6: memref<1x256xf32, #tpu.memory_space<vmem>>) attributes {dimension_semantics = [#tpu.dimension_semantics<parallel>, #tpu.dimension_semantics<parallel>, #tpu.dimension_semantics<arbitrary>], iteration_bounds = array<i64: 2, 1, 1>, scalar_prefetch = 0 : i64, scratch_operands = 1 : i64, tpu.core_type = #tpu.core_type<tc>, window_params = [{transform_indices = @transform_0, window_bounds = array<i64: 1, 248, 32>}, {transform_indices = @transform_1, window_bounds = array<i64: 1, 32, 256>}, {transform_indices = @transform_2, window_bounds = array<i64: 1, 1, 256>}]} {
    %c0 = arith.constant 0 : index
    %c0_0 = arith.constant 0 : index
    %c0_1 = arith.constant 0 : index
    %0 = vector.load %arg3[%c0, %c0_0, %c0_1] : memref<1x248x32xbf16, #tpu.memory_space<vmem>>, vector<1x248x32xbf16>
    %1 = vector.shape_cast %0 : vector<1x248x32xbf16> to vector<248x32xbf16>
    %2 = arith.extf %1 : vector<248x32xbf16> to vector<248x32xf32>
    %3 = arith.mulf %2, %2 : vector<248x32xf32>
    %cst = arith.constant dense<0.000000e+00> : vector<248xf32>
    %4 = vector.multi_reduction <add>, %3, %cst [1] : vector<248x32xf32> to vector<248xf32>
    %5 = vector.shape_cast %4 : vector<248xf32> to vector<248x1xf32>
    %cst_2 = arith.constant 1.000000e-16 : f32
    %6 = vector.broadcast %cst_2 : f32 to vector<248x1xf32>
    %7 = arith.addf %5, %6 : vector<248x1xf32>
    %8 = math.rsqrt %7 : vector<248x1xf32>
    %9 = vector.broadcast %8 : vector<248x1xf32> to vector<248x32xf32>
    %10 = arith.mulf %2, %9 : vector<248x32xf32>
    %11 = arith.truncf %10 : vector<248x32xf32> to vector<248x32xbf16>
    %c0_3 = arith.constant 0 : index
    %c0_4 = arith.constant 0 : index
    %c0_5 = arith.constant 0 : index
    %12 = vector.load %arg4[%c0_3, %c0_4, %c0_5] : memref<1x32x256xbf16, #tpu.memory_space<vmem>>, vector<1x32x256xbf16>
    %13 = vector.shape_cast %12 : vector<1x32x256xbf16> to vector<32x256xbf16>
    %cst_6 = arith.constant dense<0.000000e+00> : vector<248x256xf32>
    %14 = tpu.matmul %11, %13, %cst_6 {dimension_numbers = #tpu.dot_dimension_numbers<[1], [0], [0], [1], [0, 0, 1, 1], [], []>} : vector<248x32xbf16>, vector<32x256xbf16>, vector<248x256xf32> -> vector<248x256xf32>
    %15 = tpu.iota {dimensions = array<i32: 0>} : vector<248x256xi32>
    %c248_i32 = arith.constant 248 : i32
    %16 = arith.muli %arg2, %c248_i32 : i32
    %17 = vector.broadcast %16 : i32 to vector<248x256xi32>
    %18 = arith.addi %15, %17 : vector<248x256xi32>
    %c247_i32 = arith.constant 247 : i32
    %19 = vector.broadcast %c247_i32 : i32 to vector<248x256xi32>
    %20 = arith.cmpi slt, %18, %19 : vector<248x256xi32>
    %cst_7 = arith.constant 0xFF800000 : f32
    %21 = vector.broadcast %cst_7 : f32 to vector<248x256xf32>
    %22 = arith.select %20, %14, %21 : vector<248x256xi1>, vector<248x256xf32>
    %cst_8 = arith.constant dense<0xFF800000> : vector<256xf32>
    %23 = vector.multi_reduction <maximumf>, %22, %cst_8 [0] : vector<248x256xf32> to vector<256xf32>
    %24 = vector.shape_cast %23 : vector<256xf32> to vector<1x256xf32>
    %25 = vector.broadcast %24 : vector<1x256xf32> to vector<248x256xf32>
    %26 = arith.cmpf oge, %22, %25 : vector<248x256xf32>
    %c1073741824_i32 = arith.constant 1073741824 : i32
    %27 = vector.broadcast %c1073741824_i32 : i32 to vector<248x256xi32>
    %28 = arith.select %26, %18, %27 : vector<248x256xi1>, vector<248x256xi32>
    %cst_9 = arith.constant dense<2147483647> : vector<256xi32>
    %29 = vector.multi_reduction <minsi>, %28, %cst_9 [0] : vector<248x256xi32> to vector<256xi32>
    %30 = vector.shape_cast %29 : vector<256xi32> to vector<1x256xi32>
    %c0_i32 = arith.constant 0 : i32
    %31 = arith.cmpi eq, %arg2, %c0_i32 : i32
    %32 = arith.extui %31 : i1 to i32
    %c0_i32_10 = arith.constant 0 : i32
    %33 = arith.cmpi ne, %32, %c0_i32_10 : i32
    scf.if %33 {
      %c0_13 = arith.constant 0 : index
      %c0_14 = arith.constant 0 : index
      %37 = vector.load %arg6[%c0_13, %c0_14] : memref<1x256xf32, #tpu.memory_space<vmem>>, vector<1x256xf32>
      tpu.vector_store %arg6[%c0_13, %c0_14], %24 {strides = array<i32>} : memref<1x256xf32, #tpu.memory_space<vmem>>, vector<1x256xf32>,
      %c0_15 = arith.constant 0 : index
      %c0_16 = arith.constant 0 : index
      %c0_17 = arith.constant 0 : index
      %38 = vector.load %arg5[%c0_15, %c0_16, %c0_17] : memref<1x1x256xi32, #tpu.memory_space<vmem>>, vector<1x1x256xi32>
      %39 = vector.shape_cast %38 : vector<1x1x256xi32> to vector<1x256xi32>
      %40 = vector.shape_cast %30 : vector<1x256xi32> to vector<1x1x256xi32>
      tpu.vector_store %arg5[%c0_15, %c0_16, %c0_17], %40 {strides = array<i32>} : memref<1x1x256xi32, #tpu.memory_space<vmem>>, vector<1x1x256xi32>,
    } else {
    }
    %c0_i32_11 = arith.constant 0 : i32
    %34 = arith.cmpi sgt, %arg2, %c0_i32_11 : i32
    %35 = arith.extui %34 : i1 to i32
    %c0_i32_12 = arith.constant 0 : i32
    %36 = arith.cmpi ne, %35, %c0_i32_12 : i32
    scf.if %36 {
      %c0_13 = arith.constant 0 : index
      %c0_14 = arith.constant 0 : index
      %37 = vector.load %arg6[%c0_13, %c0_14] : memref<1x256xf32, #tpu.memory_space<vmem>>, vector<1x256xf32>
      %38 = arith.cmpf ogt, %24, %37 : vector<1x256xf32>
      %39 = arith.select %38, %24, %37 : vector<1x256xi1>, vector<1x256xf32>
      %c0_15 = arith.constant 0 : index
      %c0_16 = arith.constant 0 : index
      %40 = vector.load %arg6[%c0_15, %c0_16] : memref<1x256xf32, #tpu.memory_space<vmem>>, vector<1x256xf32>
      tpu.vector_store %arg6[%c0_15, %c0_16], %39 {strides = array<i32>} : memref<1x256xf32, #tpu.memory_space<vmem>>, vector<1x256xf32>,
      %c0_17 = arith.constant 0 : index
      %c0_18 = arith.constant 0 : index
      %c0_19 = arith.constant 0 : index
      %41 = vector.load %arg5[%c0_17, %c0_18, %c0_19] : memref<1x1x256xi32, #tpu.memory_space<vmem>>, vector<1x1x256xi32>
      %42 = vector.shape_cast %41 : vector<1x1x256xi32> to vector<1x256xi32>
      %43 = arith.select %38, %30, %42 : vector<1x256xi1>, vector<1x256xi32>
      %c0_20 = arith.constant 0 : index
      %c0_21 = arith.constant 0 : index
      %c0_22 = arith.constant 0 : index
      %44 = vector.load %arg5[%c0_20, %c0_21, %c0_22] : memref<1x1x256xi32, #tpu.memory_space<vmem>>, vector<1x1x256xi32>
      %45 = vector.shape_cast %44 : vector<1x1x256xi32> to vector<1x256xi32>
      %46 = vector.shape_cast %43 : vector<1x256xi32> to vector<1x1x256xi32>
      tpu.vector_store %arg5[%c0_20, %c0_21, %c0_22], %46 {strides = array<i32>} : memref<1x1x256xi32, #tpu.memory_space<vmem>>, vector<1x1x256xi32>,
    } else {
    }
    return
  }
  func.func @transform_0(%arg0: i32, %arg1: i32, %arg2: i32) -> (i32, i32, i32) {
    %c0_i32 = arith.constant 0 : i32
    %c0_i32_0 = arith.constant 0 : i32
    return %arg0, %arg2, %c0_i32 : i32, i32, i32
  }
  func.func @transform_1(%arg0: i32, %arg1: i32, %arg2: i32) -> (i32, i32, i32) {
    %c0_i32 = arith.constant 0 : i32
    %c0_i32_0 = arith.constant 0 : i32
    return %arg0, %c0_i32, %arg1 : i32, i32, i32
  }
  func.func @transform_2(%arg0: i32, %arg1: i32, %arg2: i32) -> (i32, i32, i32) {
    %c0_i32 = arith.constant 0 : i32
    %c0_i32_0 = arith.constant 0 : i32
    return %arg0, %c0_i32, %arg1 : i32, i32, i32
  }
}

module attributes {stable_mosaic.version = 11 : i64} {
  func.func @kernel(%arg0: i32, %arg1: memref<1x16x32xf32, #tpu.memory_space<vmem>>, %arg2: memref<1x16x32xf32, #tpu.memory_space<vmem>>, %arg3: memref<1x16x32xf32, #tpu.memory_space<vmem>>, %arg4: memref<16x32xf32, #tpu.memory_space<vmem>>, %arg5: memref<16x1xf32, #tpu.memory_space<vmem>>) attributes {dimension_semantics = [#tpu.dimension_semantics<parallel>], iteration_bounds = array<i64: 2>, scalar_prefetch = 0 : i64, scratch_operands = 2 : i64, tpu.core_type = #tpu.core_type<tc>, window_params = [{transform_indices = @transform_0, window_bounds = array<i64: 1, 16, 32>}, {transform_indices = @transform_1, window_bounds = array<i64: 1, 16, 32>}, {transform_indices = @transform_2, window_bounds = array<i64: 1, 16, 32>}]} {
    %c0 = arith.constant 0 : index
    %c0_0 = arith.constant 0 : index
    %c0_1 = arith.constant 0 : index
    %0 = vector.load %arg2[%c0, %c0_0, %c0_1] : memref<1x16x32xf32, #tpu.memory_space<vmem>>, vector<1x16x32xf32>
    %1 = vector.shape_cast %0 : vector<1x16x32xf32> to vector<16x32xf32>
    %c0_2 = arith.constant 0 : index
    %c0_3 = arith.constant 0 : index
    %c0_4 = arith.constant 0 : index
    %2 = vector.load %arg1[%c0_2, %c0_3, %c0_4] : memref<1x16x32xf32, #tpu.memory_space<vmem>>, vector<1x16x32xf32>
    %3 = vector.shape_cast %2 : vector<1x16x32xf32> to vector<16x32xf32>
    %4 = arith.mulf %1, %1 : vector<16x32xf32>
    %cst = arith.constant dense<0.000000e+00> : vector<16xf32>
    %5 = vector.multi_reduction <add>, %4, %cst [1] : vector<16x32xf32> to vector<16xf32>
    %6 = vector.shape_cast %5 : vector<16xf32> to vector<16x1xf32>
    %7 = math.sqrt %6 : vector<16x1xf32>
    %cst_5 = arith.constant 9.99999993E-9 : f32
    %8 = vector.broadcast %cst_5 : f32 to vector<16x1xf32>
    %9 = arith.addf %7, %8 : vector<16x1xf32>
    %cst_6 = arith.constant 1.000000e+00 : f32
    %10 = vector.broadcast %cst_6 : f32 to vector<16x1xf32>
    %11 = arith.divf %10, %9 : vector<16x1xf32>
    %12 = arith.mulf %3, %3 : vector<16x32xf32>
    %cst_7 = arith.constant dense<0.000000e+00> : vector<16xf32>
    %13 = vector.multi_reduction <add>, %12, %cst_7 [1] : vector<16x32xf32> to vector<16xf32>
    %14 = vector.shape_cast %13 : vector<16xf32> to vector<16x1xf32>
    %15 = math.sqrt %14 : vector<16x1xf32>
    %cst_8 = arith.constant 9.99999993E-9 : f32
    %16 = vector.broadcast %cst_8 : f32 to vector<16x1xf32>
    %17 = arith.addf %15, %16 : vector<16x1xf32>
    %cst_9 = arith.constant 1.000000e+00 : f32
    %18 = vector.broadcast %cst_9 : f32 to vector<16x1xf32>
    %19 = arith.divf %18, %17 : vector<16x1xf32>
    %20 = vector.broadcast %11 : vector<16x1xf32> to vector<16x32xf32>
    %21 = arith.mulf %1, %20 : vector<16x32xf32>
    %c0_10 = arith.constant 0 : index
    %c0_11 = arith.constant 0 : index
    %22 = vector.load %arg4[%c0_10, %c0_11] : memref<16x32xf32, #tpu.memory_space<vmem>>, vector<16x32xf32>
    tpu.vector_store %arg4[%c0_10, %c0_11], %21 {strides = array<i32>} : memref<16x32xf32, #tpu.memory_space<vmem>>, vector<16x32xf32>,
    %23 = arith.mulf %1, %3 : vector<16x32xf32>
    %cst_12 = arith.constant dense<0.000000e+00> : vector<16xf32>
    %24 = vector.multi_reduction <add>, %23, %cst_12 [1] : vector<16x32xf32> to vector<16xf32>
    %25 = vector.shape_cast %24 : vector<16xf32> to vector<16x1xf32>
    %26 = arith.mulf %25, %19 : vector<16x1xf32>
    %c0_13 = arith.constant 0 : index
    %c0_14 = arith.constant 0 : index
    %27 = vector.load %arg5[%c0_13, %c0_14] : memref<16x1xf32, #tpu.memory_space<vmem>>, vector<16x1xf32>
    tpu.vector_store %arg5[%c0_13, %c0_14], %26 {strides = array<i32>} : memref<16x1xf32, #tpu.memory_space<vmem>>, vector<16x1xf32>,
    %c0_15 = arith.constant 0 : index
    %c0_16 = arith.constant 0 : index
    %c0_17 = arith.constant 0 : index
    %28 = vector.load %arg1[%c0_15, %c0_16, %c0_17] : memref<1x16x32xf32, #tpu.memory_space<vmem>>, vector<1x1x32xf32>
    %29 = vector.shape_cast %28 : vector<1x1x32xf32> to vector<1x32xf32>
    %c0_18 = arith.constant 0 : index
    %c0_19 = arith.constant 0 : index
    %c0_20 = arith.constant 0 : index
    %30 = vector.load %arg3[%c0_18, %c0_19, %c0_20] : memref<1x16x32xf32, #tpu.memory_space<vmem>>, vector<1x1x32xf32>
    %31 = vector.shape_cast %30 : vector<1x1x32xf32> to vector<1x32xf32>
    %32 = vector.shape_cast %29 : vector<1x32xf32> to vector<1x1x32xf32>
    tpu.vector_store %arg3[%c0_18, %c0_19, %c0_20], %32 {strides = array<i32>} : memref<1x16x32xf32, #tpu.memory_space<vmem>>, vector<1x1x32xf32>,
    %c1_i32 = arith.constant 1 : i32
    %c8_i32 = arith.constant 8 : i32
    %33 = arith.addi %c1_i32, %c8_i32 : i32
    %c1_i32_21 = arith.constant 1 : i32
    %34 = scf.for %arg6 = %c1_i32 to %33 step %c1_i32_21 iter_args(%arg7 = %29) -> (vector<1x32xf32>)  : i32 {
      %35 = arith.index_cast %arg6 : i32 to index
      %c0_23 = arith.constant 0 : index
      %36 = vector.load %arg4[%35, %c0_23] : memref<16x32xf32, #tpu.memory_space<vmem>>, vector<1x32xf32>
      %c0_24 = arith.constant 0 : index
      %37 = arith.index_cast %arg6 : i32 to index
      %c0_25 = arith.constant 0 : index
      %38 = vector.load %arg1[%c0_24, %37, %c0_25] : memref<1x16x32xf32, #tpu.memory_space<vmem>>, vector<1x1x32xf32>
      %39 = vector.shape_cast %38 : vector<1x1x32xf32> to vector<1x32xf32>
      %40 = arith.index_cast %arg6 : i32 to index
      %c0_26 = arith.constant 0 : index
      %41 = vector.load %arg5[%40, %c0_26] : memref<16x1xf32, #tpu.memory_space<vmem>>, vector<1x1xf32>
      %42 = arith.mulf %arg7, %36 : vector<1x32xf32>
      %cst_27 = arith.constant dense<0.000000e+00> : vector<1xf32>
      %43 = vector.multi_reduction <add>, %42, %cst_27 [1] : vector<1x32xf32> to vector<1xf32>
      %44 = vector.shape_cast %43 : vector<1xf32> to vector<1x1xf32>
      %45 = arith.addf %44, %41 : vector<1x1xf32>
      %46 = math.absf %45 : vector<1x1xf32>
      %cst_28 = arith.constant 9.99999993E-9 : f32
      %47 = vector.broadcast %cst_28 : f32 to vector<1x1xf32>
      %48 = arith.cmpf olt, %46, %47 : vector<1x1xf32>
      %cst_29 = arith.constant 0.000000e+00 : f32
      %49 = vector.broadcast %cst_29 : f32 to vector<1x1xf32>
      %50 = arith.cmpf olt, %45, %49 : vector<1x1xf32>
      %cst_30 = arith.constant -9.99999993E-9 : f32
      %cst_31 = arith.constant 9.99999993E-9 : f32
      %51 = vector.broadcast %cst_30 : f32 to vector<1x1xf32>
      %52 = vector.broadcast %cst_31 : f32 to vector<1x1xf32>
      %53 = arith.select %50, %51, %52 : vector<1x1xi1>, vector<1x1xf32>
      %54 = arith.select %48, %53, %45 : vector<1x1xi1>, vector<1x1xf32>
      %55 = tpu.reciprocal %54 {approx = true} : vector<1x1xf32> -> vector<1x1xf32>
      %56 = arith.mulf %44, %55 : vector<1x1xf32>
      %57 = vector.broadcast %56 : vector<1x1xf32> to vector<1x32xf32>
      %58 = arith.mulf %57, %arg7 : vector<1x32xf32>
      %59 = arith.mulf %41, %55 : vector<1x1xf32>
      %60 = vector.broadcast %59 : vector<1x1xf32> to vector<1x32xf32>
      %61 = arith.mulf %60, %39 : vector<1x32xf32>
      %62 = arith.addf %58, %61 : vector<1x32xf32>
      %c0_32 = arith.constant 0 : index
      %63 = arith.index_cast %arg6 : i32 to index
      %c0_33 = arith.constant 0 : index
      %64 = vector.load %arg3[%c0_32, %63, %c0_33] : memref<1x16x32xf32, #tpu.memory_space<vmem>>, vector<1x1x32xf32>
      %65 = vector.shape_cast %64 : vector<1x1x32xf32> to vector<1x32xf32>
      %66 = vector.shape_cast %62 : vector<1x32xf32> to vector<1x1x32xf32>
      tpu.vector_store %arg3[%c0_32, %63, %c0_33], %66 {strides = array<i32>} : memref<1x16x32xf32, #tpu.memory_space<vmem>>, vector<1x1x32xf32>,
      scf.yield %62 : vector<1x32xf32>
    }
    %c8_i32_22 = arith.constant 8 : i32
    return
  }
  func.func @transform_0(%arg0: i32) -> (i32, i32, i32) {
    %c0_i32 = arith.constant 0 : i32
    %c0_i32_0 = arith.constant 0 : i32
    %c0_i32_1 = arith.constant 0 : i32
    return %arg0, %c0_i32, %c0_i32_0 : i32, i32, i32
  }
  func.func @transform_1(%arg0: i32) -> (i32, i32, i32) {
    %c0_i32 = arith.constant 0 : i32
    %c0_i32_0 = arith.constant 0 : i32
    %c0_i32_1 = arith.constant 0 : i32
    return %arg0, %c0_i32, %c0_i32_0 : i32, i32, i32
  }
  func.func @transform_2(%arg0: i32) -> (i32, i32, i32) {
    %c0_i32 = arith.constant 0 : i32
    %c0_i32_0 = arith.constant 0 : i32
    %c0_i32_1 = arith.constant 0 : i32
    return %arg0, %c0_i32, %c0_i32_0 : i32, i32, i32
  }
}

</mosaic_0001>

<llo_original>
// kernel: _lambda_.2
$region0: #{_lambda_.2}
  #allocation0 [shape = 'u32[]', space=smem, size = 0x4, offset = 0x4, fixed_abs, tag = 'smem constant byte address 0x4 - core index']
  #allocation1 [shape = 'u32[72,128]{1,0:T(1,128)}', space=vmem, size = 0x9000, scoped, tag = 'internal scratch']
  #allocation2 [shape = 'f32[1,256]{1,0:T(1,128)}', space=vmem, size = 0x400, scoped, tag = 'scratch operand']
  %s0 = inlined_call_operand.vmem [shape: bf16[2,248,32], index: 0, kind: input, shape index: {}]
  %s1 = inlined_call_operand.vmem [shape: bf16[2,32,256], index: 1, kind: input, shape index: {}]
  %s2 = inlined_call_operand.vmem [shape: s32[2,1,256], index: 2, kind: output, shape index: {}]
  %s3 = sld [smem:[#allocation0]]
  $region49: #{_lambda_.2} parent=0
    _
  %s5 = ssub.s32 1, %s3
  %s6 = scalar_select 0, %s5, %s3
  loop: start=0, step=1, limit=4
  $region2: #{_lambda_.2} parent=0 // loop_pre_header
    _
  $region3: #{_lambda_.2} parent=0 // loop_header
    %s8 = sphi 0, %s12
    %p9 = scmp.ge.s32.totalorder %s8, 4
    %s15 = sphi 0, %s34
    %s16 = sphi 0, %s30
    %s17 = sphi 0, %s26
    %s18 = sphi 0, %s15
    %s19 = sphi 0, %s16
    %s20 = sphi 0, %s17
    %s21 = sphi 0, %s18
    %s22 = sphi 0, %s19
    %s23 = sphi 0, %s20
    %s39 = sphi 0, %s41
    %s42 = sphi 0, %s39
    %s43 = sphi 0, %s42
    %s59 = sphi 0, %s43
    %s67 = sphi 0, %s69
    %s70 = sphi 0, %s67
    %s71 = sphi 0, %s70
    %s87 = sphi 0, %s71
    %s95 = sphi 0, %s97
    %s98 = sphi 0, %s95
    %s99 = sphi 0, %s98
    %s115 = sphi 0, %s99
  $region4: #{_lambda_.2} parent=0 // loop_header_branch
    %11 = sbr.rel (%p9) target = $region8
  $region5: #{_lambda_.2} parent=0 // loop_body
    %s13 = ssub.s32 %s8, 1
    %s14 = ssub.s32 %s8, 2
    %s24 = sadd.s32 1, %s17
    %p25 = scmp.ge.s32.totalorder %s24, 1
    %s26 = scalar_select %p25, 0, %s24
    %s27 = sadd.s32 1, %s16
    %s28 = scalar_select %p25, %s27, %s16
    %p29 = scmp.ge.s32.totalorder %s28, 1
    %s30 = scalar_select %p29, 0, %s28
    %s31 = sadd.s32 1, %s15
    %s32 = scalar_select %p29, %s31, %s15
    %p33 = scmp.ge.s32.totalorder %s32, 2
    %s34 = scalar_select %p33, 0, %s32
    %s35 = ssub.s32 %s15, %s34
    %s36 = ssub.s32 %s17, %s26
    %s37 = sor.u32 %s35, %s36
    %p38 = scmp.eq.s32.totalorder %s37, 0
    %s40 = sadd.s32 %s39, 1
    %s41 = scalar_select %p38, %s39, %s40
    %p44 = pneg %p38
    %p45 = scmp.eq.s32.totalorder %s8, 1
    %p46 = por %p44, %p45
    %p47 = scmp.ne.s32.totalorder %s39, %s42
    %p48 = scmp.eq.s32.totalorder %s8, 0
    %p49 = por %p47, %p48
    %p50 = scmp.ne.s32.totalorder %s39, %s42
    %p51 = scmp.eq.s32.totalorder %s13, 1
    %p52 = por %p50, %p51
    %p53 = scmp.ne.s32.totalorder %s42, %s43
    %p54 = scmp.eq.s32.totalorder %s13, 0
    %p55 = por %p53, %p54
    %p56 = scmp.ne.s32.totalorder %s42, %s43
    %p57 = scmp.eq.s32.totalorder %s14, 1
    %p58 = por %p56, %p57
    %p60 = scmp.ne.s32.totalorder %s43, %s59
    %p61 = scmp.eq.s32.totalorder %s14, 0
    %p62 = por %p60, %p61
    %s63 = ssub.s32 %s15, %s34
    %s64 = ssub.s32 %s16, %s30
    %s65 = sor.u32 %s63, %s64
    %p66 = scmp.eq.s32.totalorder %s65, 0
    %s68 = sadd.s32 %s67, 1
    %s69 = scalar_select %p66, %s67, %s68
    %p72 = pneg %p66
    %p73 = scmp.eq.s32.totalorder %s8, 1
    %p74 = por %p72, %p73
    %p75 = scmp.ne.s32.totalorder %s67, %s70
    %p76 = scmp.eq.s32.totalorder %s8, 0
    %p77 = por %p75, %p76
    %p78 = scmp.ne.s32.totalorder %s67, %s70
    %p79 = scmp.eq.s32.totalorder %s13, 1
    %p80 = por %p78, %p79
    %p81 = scmp.ne.s32.totalorder %s70, %s71
    %p82 = scmp.eq.s32.totalorder %s13, 0
    %p83 = por %p81, %p82
    %p84 = scmp.ne.s32.totalorder %s70, %s71
    %p85 = scmp.eq.s32.totalorder %s14, 1
    %p86 = por %p84, %p85
    %p88 = scmp.ne.s32.totalorder %s71, %s87
    %p89 = scmp.eq.s32.totalorder %s14, 0
    %p90 = por %p88, %p89
    %s91 = ssub.s32 %s15, %s34
    %s92 = ssub.s32 %s16, %s30
    %s93 = sor.u32 %s91, %s92
    %p94 = scmp.eq.s32.totalorder %s93, 0
    %s96 = sadd.s32 %s95, 1
    %s97 = scalar_select %p94, %s95, %s96
    %p100 = pneg %p94
    %p101 = scmp.eq.s32.totalorder %s8, 1
    %p102 = por %p100, %p101
    %p103 = scmp.ne.s32.totalorder %s95, %s98
    %p104 = scmp.eq.s32.totalorder %s8, 0
    %p105 = por %p103, %p104
    %p106 = scmp.ne.s32.totalorder %s95, %s98
    %p107 = scmp.eq.s32.totalorder %s13, 1
    %p108 = por %p106, %p107
    %p109 = scmp.ne.s32.totalorder %s98, %s99
    %p110 = scmp.eq.s32.totalorder %s13, 0
    %p111 = por %p109, %p110
    %p112 = scmp.ne.s32.totalorder %s98, %s99
    %p113 = scmp.eq.s32.totalorder %s14, 1
    %p114 = por %p112, %p113
    %p116 = scmp.ne.s32.totalorder %s99, %s115
    %p117 = scmp.eq.s32.totalorder %s14, 0
    %p118 = por %p116, %p117
    %p119 = scmp.le.s32.totalorder 1, %s8
    %p120 = scmp.lt.s32.totalorder %s8, 3
    %p121 = pnand %p119, %p120
    %p122 = pneg %p121
    // Predicated region
    $region9: #{_lambda_.2} parent=5 // pred_check
      _
    $region10: #{_lambda_.2} parent=5 // pred_check_branch
      %124 = sbr.rel (%p121) target = $region12
    $region11: #{_lambda_.2} parent=5 // pred_region
      %s125 = ssub.s32 %s8, 1
    $region12: #{_lambda_.2} parent=5 // pred_fallthru
      _
    %p126 = scmp.lt.s32.totalorder %s8, 2
    // Predicated region
    $region13: #{_lambda_.2} parent=5 // pred_check
      %p127 = pneg %p126
    $region14: #{_lambda_.2} parent=5 // pred_check_branch
      %129 = sbr.rel (%p127) target = $region16
    $region15: #{_lambda_.2} parent=5 // pred_region
      // Predicated region
      $region17: #{_lambda_.2} parent=15 // pred_check
        %p130 = pneg %p49
      $region18: #{_lambda_.2} parent=15 // pred_check_branch
        %132 = sbr.rel (%p130) target = $region20
      $region19: #{_lambda_.2} parent=15 // pred_region
        %s133 = smul.u32 31, %s17
        %p134 = scmp.lt.s32.totalorder %s15, 1
        %s135 = scalar_select %p134, %s15, 1
        %p136 = scmp.lt.s32.totalorder %s133, 30
        %s137 = scalar_select %p136, %s133, 30
        %s138 = smul.addr %s135, 31
        %s139 = sadd.s32 %s137, %s138
        %s140 = smul.addr %s139, 4
        %s141 = scalar_lea.vmem %s0, %s140
        %s142 = smul.u32 31, %s17
      $region20: #{_lambda_.2} parent=15 // pred_fallthru
        _
      // Predicated region
      $region21: #{_lambda_.2} parent=15 // pred_check
        %p143 = pneg %p77
      $region22: #{_lambda_.2} parent=15 // pred_check_branch
        %145 = sbr.rel (%p143) target = $region24
      $region23: #{_lambda_.2} parent=15 // pred_region
        %s146 = smul.u32 2, %s16
        %p147 = scmp.lt.s32.totalorder %s15, 1
        %s148 = scalar_select %p147, %s15, 1
        %p149 = scmp.lt.s32.totalorder %s146, 1
        %s150 = scalar_select %p149, %s146, 1
        %s151 = smul.addr %s148, 8
        %s152 = sadd.s32 %s150, %s151
        %s153 = smul.addr %s152, 4
        %s154 = scalar_lea.vmem %s1, %s153
        %s155 = smul.u32 2, %s16
      $region24: #{_lambda_.2} parent=15 // pred_fallthru
        _
    $region16: #{_lambda_.2} parent=5 // pred_fallthru
      _
    %p156 = scmp.le.s32.totalorder 1, %s8
    %p157 = scmp.lt.s32.totalorder %s8, 3
    %p158 = pnand %p156, %p157
    %p159 = pneg %p158
    // Predicated region
    $region25: #{_lambda_.2} parent=5 // pred_check
      _
    $region26: #{_lambda_.2} parent=5 // pred_check_branch
      %161 = sbr.rel (%p158) target = $region28
    $region27: #{_lambda_.2} parent=5 // pred_region
      %s162 = ssub.s32 %s8, 1
      %s163 = smul.u32 31, %s20
      %p164 = scmp.lt.s32.totalorder %s18, 1
      %s165 = scalar_select %p164, %s18, 1
      %p166 = scmp.lt.s32.totalorder %s163, 30
      %s167 = scalar_select %p166, %s163, 30
      %s168 = smul.addr %s165, 31
      %s169 = sadd.s32 %s167, %s168
      %s170 = smul.addr %s169, 4
      %s171 = scalar_lea.vmem %s0, %s170
      %p172 = pneg %p55
      %p173 = pneg %p52
      %s174 = smul.u32 2, %s19
      %p175 = scmp.lt.s32.totalorder %s18, 1
      %s176 = scalar_select %p175, %s18, 1
      %p177 = scmp.lt.s32.totalorder %s174, 1
      %s178 = scalar_select %p177, %s174, 1
      %s179 = smul.addr %s176, 8
      %s180 = sadd.s32 %s178, %s179
      %s181 = smul.addr %s180, 4
      %s182 = scalar_lea.vmem %s1, %s181
      %p183 = pneg %p83
      %p184 = pneg %p80
      %p185 = pneg %p111
      %p186 = pneg %p108
      %s187 = smul.u32 2, %s19
      %p188 = scmp.lt.s32.totalorder %s18, 1
      %s189 = scalar_select %p188, %s18, 1
      %p190 = scmp.lt.s32.totalorder %s187, 1
      %s191 = scalar_select %p190, %s187, 1
      %s192 = smul.addr %s189, 2
      %s193 = sadd.s32 %s191, %s192
      %s194 = scalar_lea.vmem %s2, %s193
      %s195 = smul.u32 31, %s20
      %p196 = scmp.lt.s32.totalorder %s18, 1
      %s197 = scalar_select %p196, %s18, 1
      %p198 = scmp.lt.s32.totalorder %s195, 30
      %s199 = scalar_select %p198, %s195, 30
      %s200 = smul.addr %s197, 31
      %s201 = sadd.s32 %s199, %s200
      %s202 = smul.addr %s201, 4
      %s203 = scalar_lea.vmem %s0, %s202
      %s204 = smul.u32 31, %s20
      %s205 = smul.u32 2, %s19
      %p206 = scmp.lt.s32.totalorder %s18, 1
      %s207 = scalar_select %p206, %s18, 1
      %p208 = scmp.lt.s32.totalorder %s205, 1
      %s209 = scalar_select %p208, %s205, 1
      %s210 = smul.addr %s207, 8
      %s211 = sadd.s32 %s209, %s210
      %s212 = smul.addr %s211, 4
      %s213 = scalar_lea.vmem %s1, %s212
      %s214 = smul.u32 2, %s19
      %s215 = smul.u32 2, %s19
      %p216 = scmp.lt.s32.totalorder %s18, 1
      %s217 = scalar_select %p216, %s18, 1
      %p218 = scmp.lt.s32.totalorder %s215, 1
      %s219 = scalar_select %p218, %s215, 1
      %s220 = smul.addr %s217, 2
      %s221 = sadd.s32 %s219, %s220
      %s222 = scalar_lea.vmem %s2, %s221
      %s223 = smul.u32 2, %s19
      %v225 = vld [vmem:[%s203] sm:$0xf]
      %v226 = vld [vmem:[%s203 + $0x4] sm:$0xf]
      %v227 = vld [vmem:[%s203 + $0x8] sm:$0xf]
      %v228 = vld [vmem:[%s203 + $0xc] sm:$0xf]
      %v229 = vld [vmem:[%s203 + $0x10] sm:$0xf]
      %v230 = vld [vmem:[%s203 + $0x14] sm:$0xf]
      %v231 = vld [vmem:[%s203 + $0x18] sm:$0xf]
      %v232 = vld [vmem:[%s203 + $0x1c] sm:$0xf]
      %v233 = vld [vmem:[%s203 + $0x20] sm:$0xf]
      %v234 = vld [vmem:[%s203 + $0x24] sm:$0xf]
      %v235 = vld [vmem:[%s203 + $0x28] sm:$0xf]
      %v236 = vld [vmem:[%s203 + $0x2c] sm:$0xf]
      %v237 = vld [vmem:[%s203 + $0x30] sm:$0xf]
      %v238 = vld [vmem:[%s203 + $0x34] sm:$0xf]
      %v239 = vld [vmem:[%s203 + $0x38] sm:$0xf]
      %v240 = vld [vmem:[%s203 + $0x3c] sm:$0xf]
      %v241 = vld [vmem:[%s203 + $0x40] sm:$0xf]
      %v242 = vld [vmem:[%s203 + $0x44] sm:$0xf]
      %v243 = vld [vmem:[%s203 + $0x48] sm:$0xf]
      %v244 = vld [vmem:[%s203 + $0x4c] sm:$0xf]
      %v245 = vld [vmem:[%s203 + $0x50] sm:$0xf]
      %v246 = vld [vmem:[%s203 + $0x54] sm:$0xf]
      %v247 = vld [vmem:[%s203 + $0x58] sm:$0xf]
      %v248 = vld [vmem:[%s203 + $0x5c] sm:$0xf]
      %v249 = vld [vmem:[%s203 + $0x60] sm:$0xf]
      %v250 = vld [vmem:[%s203 + $0x64] sm:$0xf]
      %v251 = vld [vmem:[%s203 + $0x68] sm:$0xf]
      %v252 = vld [vmem:[%s203 + $0x6c] sm:$0xf]
      %v253 = vld [vmem:[%s203 + $0x70] sm:$0xf]
      %v254 = vld [vmem:[%s203 + $0x74] sm:$0xf]
      %v255 = vld [vmem:[%s203 + $0x78] sm:$0xf]
      %v256 = vunpack.c.l.bf16 %v225
      %v257 = vunpack.c.l.bf16 %v226
      %v258 = vunpack.c.l.bf16 %v227
      %v259 = vunpack.c.l.bf16 %v228
      %v260 = vunpack.c.l.bf16 %v229
      %v261 = vunpack.c.l.bf16 %v230
      %v262 = vunpack.c.l.bf16 %v231
      %v263 = vunpack.c.l.bf16 %v232
      %v264 = vunpack.c.l.bf16 %v233
      %v265 = vunpack.c.l.bf16 %v234
      %v266 = vunpack.c.l.bf16 %v235
      %v267 = vunpack.c.l.bf16 %v236
      %v268 = vunpack.c.l.bf16 %v237
      %v269 = vunpack.c.l.bf16 %v238
      %v270 = vunpack.c.l.bf16 %v239
      %v271 = vunpack.c.l.bf16 %v240
      %v272 = vunpack.c.l.bf16 %v241
      %v273 = vunpack.c.l.bf16 %v242
      %v274 = vunpack.c.l.bf16 %v243
      %v275 = vunpack.c.l.bf16 %v244
      %v276 = vunpack.c.l.bf16 %v245
      %v277 = vunpack.c.l.bf16 %v246
      %v278 = vunpack.c.l.bf16 %v247
      %v279 = vunpack.c.l.bf16 %v248
      %v280 = vunpack.c.l.bf16 %v249
      %v281 = vunpack.c.l.bf16 %v250
      %v282 = vunpack.c.l.bf16 %v251
      %v283 = vunpack.c.l.bf16 %v252
      %v284 = vunpack.c.l.bf16 %v253
      %v285 = vunpack.c.l.bf16 %v254
      %v286 = vunpack.c.l.bf16 %v255
      %v287 = vmul.f32 %v256, %v256
      %v288 = vmul.f32 %v257, %v257
      %v289 = vmul.f32 %v258, %v258
      %v290 = vmul.f32 %v259, %v259
      %v291 = vmul.f32 %v260, %v260
      %v292 = vmul.f32 %v261, %v261
      %v293 = vmul.f32 %v262, %v262
      %v294 = vmul.f32 %v263, %v263
      %v295 = vmul.f32 %v264, %v264
      %v296 = vmul.f32 %v265, %v265
      %v297 = vmul.f32 %v266, %v266
      %v298 = vmul.f32 %v267, %v267
      %v299 = vmul.f32 %v268, %v268
      %v300 = vmul.f32 %v269, %v269
      %v301 = vmul.f32 %v270, %v270
      %v302 = vmul.f32 %v271, %v271
      %v303 = vmul.f32 %v272, %v272
      %v304 = vmul.f32 %v273, %v273
      %v305 = vmul.f32 %v274, %v274
      %v306 = vmul.f32 %v275, %v275
      %v307 = vmul.f32 %v276, %v276
      %v308 = vmul.f32 %v277, %v277
      %v309 = vmul.f32 %v278, %v278
      %v310 = vmul.f32 %v279, %v279
      %v311 = vmul.f32 %v280, %v280
      %v312 = vmul.f32 %v281, %v281
      %v313 = vmul.f32 %v282, %v282
      %v314 = vmul.f32 %v283, %v283
      %v315 = vmul.f32 %v284, %v284
      %v316 = vmul.f32 %v285, %v285
      %v317 = vmul.f32 %v286, %v286
      %vm318 = vcmask 261120
      %v319 = vsel %vm318, %v287, 0.0
      %320 = vadd.xlane.f32.xlu0 %v319
      %v321 = vpop.xlane.xlu0 %320
      %v322 = vsel %vm318, %v288, 0.0
      %323 = vadd.xlane.f32.xlu0 %v322
      %v324 = vpop.xlane.xlu0 %323
      %v325 = vsel %vm318, %v289, 0.0
      %326 = vadd.xlane.f32.xlu0 %v325
      %v327 = vpop.xlane.xlu0 %326
      %v328 = vsel %vm318, %v290, 0.0
      %329 = vadd.xlane.f32.xlu0 %v328
      %v330 = vpop.xlane.xlu0 %329
      %v331 = vsel %vm318, %v291, 0.0
      %332 = vadd.xlane.f32.xlu0 %v331
      %v333 = vpop.xlane.xlu0 %332
      %v334 = vsel %vm318, %v292, 0.0
      %335 = vadd.xlane.f32.xlu0 %v334
      %v336 = vpop.xlane.xlu0 %335
      %v337 = vsel %vm318, %v293, 0.0
      %338 = vadd.xlane.f32.xlu0 %v337
      %v339 = vpop.xlane.xlu0 %338
      %v340 = vsel %vm318, %v294, 0.0
      %341 = vadd.xlane.f32.xlu0 %v340
      %v342 = vpop.xlane.xlu0 %341
      %v343 = vsel %vm318, %v295, 0.0
      %344 = vadd.xlane.f32.xlu0 %v343
      %v345 = vpop.xlane.xlu0 %344
      %v346 = vsel %vm318, %v296, 0.0
      %347 = vadd.xlane.f32.xlu0 %v346
      %v348 = vpop.xlane.xlu0 %347
      %v349 = vsel %vm318, %v297, 0.0
      %350 = vadd.xlane.f32.xlu0 %v349
      %v351 = vpop.xlane.xlu0 %350
      %v352 = vsel %vm318, %v298, 0.0
      %353 = vadd.xlane.f32.xlu0 %v352
      %v354 = vpop.xlane.xlu0 %353
      %v355 = vsel %vm318, %v299, 0.0
      %356 = vadd.xlane.f32.xlu0 %v355
      %v357 = vpop.xlane.xlu0 %356
      %v358 = vsel %vm318, %v300, 0.0
      %359 = vadd.xlane.f32.xlu0 %v358
      %v360 = vpop.xlane.xlu0 %359
      %v361 = vsel %vm318, %v301, 0.0
      %362 = vadd.xlane.f32.xlu0 %v361
      %v363 = vpop.xlane.xlu0 %362
      %v364 = vsel %vm318, %v302, 0.0
      %365 = vadd.xlane.f32.xlu0 %v364
      %v366 = vpop.xlane.xlu0 %365
      %v367 = vsel %vm318, %v303, 0.0
      %368 = vadd.xlane.f32.xlu0 %v367
      %v369 = vpop.xlane.xlu0 %368
      %v370 = vsel %vm318, %v304, 0.0
      %371 = vadd.xlane.f32.xlu0 %v370
      %v372 = vpop.xlane.xlu0 %371
      %v373 = vsel %vm318, %v305, 0.0
      %374 = vadd.xlane.f32.xlu0 %v373
      %v375 = vpop.xlane.xlu0 %374
      %v376 = vsel %vm318, %v306, 0.0
      %377 = vadd.xlane.f32.xlu0 %v376
      %v378 = vpop.xlane.xlu0 %377
      %v379 = vsel %vm318, %v307, 0.0
      %380 = vadd.xlane.f32.xlu0 %v379
      %v381 = vpop.xlane.xlu0 %380
      %v382 = vsel %vm318, %v308, 0.0
      %383 = vadd.xlane.f32.xlu0 %v382
      %v384 = vpop.xlane.xlu0 %383
      %v385 = vsel %vm318, %v309, 0.0
      %386 = vadd.xlane.f32.xlu0 %v385
      %v387 = vpop.xlane.xlu0 %386
      %v388 = vsel %vm318, %v310, 0.0
      %389 = vadd.xlane.f32.xlu0 %v388
      %v390 = vpop.xlane.xlu0 %389
      %v391 = vsel %vm318, %v311, 0.0
      %392 = vadd.xlane.f32.xlu0 %v391
      %v393 = vpop.xlane.xlu0 %392
      %v394 = vsel %vm318, %v312, 0.0
      %395 = vadd.xlane.f32.xlu0 %v394
      %v396 = vpop.xlane.xlu0 %395
      %v397 = vsel %vm318, %v313, 0.0
      %398 = vadd.xlane.f32.xlu0 %v397
      %v399 = vpop.xlane.xlu0 %398
      %v400 = vsel %vm318, %v314, 0.0
      %401 = vadd.xlane.f32.xlu0 %v400
      %v402 = vpop.xlane.xlu0 %401
      %v403 = vsel %vm318, %v315, 0.0
      %404 = vadd.xlane.f32.xlu0 %v403
      %v405 = vpop.xlane.xlu0 %404
      %v406 = vsel %vm318, %v316, 0.0
      %407 = vadd.xlane.f32.xlu0 %v406
      %v408 = vpop.xlane.xlu0 %407
      %v409 = vsel %vm318, %v317, 0.0
      %410 = vadd.xlane.f32.xlu0 %v409
      %v411 = vpop.xlane.xlu0 %410
      %v412 = vadd.f32 %v321, 1e-16
      %v413 = vadd.f32 %v324, 1e-16
      %v414 = vadd.f32 %v327, 1e-16
      %v415 = vadd.f32 %v330, 1e-16
      %v416 = vadd.f32 %v333, 1e-16
      %v417 = vadd.f32 %v336, 1e-16
      %v418 = vadd.f32 %v339, 1e-16
      %v419 = vadd.f32 %v342, 1e-16
      %v420 = vadd.f32 %v345, 1e-16
      %v421 = vadd.f32 %v348, 1e-16
      %v422 = vadd.f32 %v351, 1e-16
      %v423 = vadd.f32 %v354, 1e-16
      %v424 = vadd.f32 %v357, 1e-16
      %v425 = vadd.f32 %v360, 1e-16
      %v426 = vadd.f32 %v363, 1e-16
      %v427 = vadd.f32 %v366, 1e-16
      %v428 = vadd.f32 %v369, 1e-16
      %v429 = vadd.f32 %v372, 1e-16
      %v430 = vadd.f32 %v375, 1e-16
      %v431 = vadd.f32 %v378, 1e-16
      %v432 = vadd.f32 %v381, 1e-16
      %v433 = vadd.f32 %v384, 1e-16
      %v434 = vadd.f32 %v387, 1e-16
      %v435 = vadd.f32 %v390, 1e-16
      %v436 = vadd.f32 %v393, 1e-16
      %v437 = vadd.f32 %v396, 1e-16
      %v438 = vadd.f32 %v399, 1e-16
      %v439 = vadd.f32 %v402, 1e-16
      %v440 = vadd.f32 %v405, 1e-16
      %v441 = vadd.f32 %v408, 1e-16
      %v442 = vadd.f32 %v411, 1e-16
      %v443 = vrsqrt.pop %v412
      %v444 = vmul.f32 %v443, %v412
      %v445 = vmul.f32 %v444, %v443
      %v446 = vmul.f32 0.5, %v445
      %v447 = vsub.f32 1.5, %v446
      %v448 = vmul.f32 %v443, %v447
      %vm449 = vweird.f32 %v412
      %vm450 = vweird.f32 %v443
      %vm451 = vmor %vm449, %vm450
      %v452 = vsel %vm451, %v443, %v448
      %v453 = vrsqrt.pop %v413
      %v454 = vmul.f32 %v453, %v413
      %v455 = vmul.f32 %v454, %v453
      %v456 = vmul.f32 0.5, %v455
      %v457 = vsub.f32 1.5, %v456
      %v458 = vmul.f32 %v453, %v457
      %vm459 = vweird.f32 %v413
      %vm460 = vweird.f32 %v453
      %vm461 = vmor %vm459, %vm460
      %v462 = vsel %vm461, %v453, %v458
      %v463 = vrsqrt.pop %v414
      %v464 = vmul.f32 %v463, %v414
      %v465 = vmul.f32 %v464, %v463
      %v466 = vmul.f32 0.5, %v465
      %v467 = vsub.f32 1.5, %v466
      %v468 = vmul.f32 %v463, %v467
      %vm469 = vweird.f32 %v414
      %vm470 = vweird.f32 %v463
      %vm471 = vmor %vm469, %vm470
      %v472 = vsel %vm471, %v463, %v468
      %v473 = vrsqrt.pop %v415
      %v474 = vmul.f32 %v473, %v415
      %v475 = vmul.f32 %v474, %v473
      %v476 = vmul.f32 0.5, %v475
      %v477 = vsub.f32 1.5, %v476
      %v478 = vmul.f32 %v473, %v477
      %vm479 = vweird.f32 %v415
      %vm480 = vweird.f32 %v473
      %vm481 = vmor %vm479, %vm480
      %v482 = vsel %vm481, %v473, %v478
      %v483 = vrsqrt.pop %v416
      %v484 = vmul.f32 %v483, %v416
      %v485 = vmul.f32 %v484, %v483
      %v486 = vmul.f32 0.5, %v485
      %v487 = vsub.f32 1.5, %v486
      %v488 = vmul.f32 %v483, %v487
      %vm489 = vweird.f32 %v416
      %vm490 = vweird.f32 %v483
      %vm491 = vmor %vm489, %vm490
      %v492 = vsel %vm491, %v483, %v488
      %v493 = vrsqrt.pop %v417
      %v494 = vmul.f32 %v493, %v417
      %v495 = vmul.f32 %v494, %v493
      %v496 = vmul.f32 0.5, %v495
      %v497 = vsub.f32 1.5, %v496
      %v498 = vmul.f32 %v493, %v497
      %vm499 = vweird.f32 %v417
      %vm500 = vweird.f32 %v493
      %vm501 = vmor %vm499, %vm500
      %v502 = vsel %vm501, %v493, %v498
      %v503 = vrsqrt.pop %v418
      %v504 = vmul.f32 %v503, %v418
      %v505 = vmul.f32 %v504, %v503
      %v506 = vmul.f32 0.5, %v505
      %v507 = vsub.f32 1.5, %v506
      %v508 = vmul.f32 %v503, %v507
      %vm509 = vweird.f32 %v418
      %vm510 = vweird.f32 %v503
      %vm511 = vmor %vm509, %vm510
      %v512 = vsel %vm511, %v503, %v508
      %v513 = vrsqrt.pop %v419
      %v514 = vmul.f32 %v513, %v419
      %v515 = vmul.f32 %v514, %v513
      %v516 = vmul.f32 0.5, %v515
      %v517 = vsub.f32 1.5, %v516
      %v518 = vmul.f32 %v513, %v517
      %vm519 = vweird.f32 %v419
      %vm520 = vweird.f32 %v513
      %vm521 = vmor %vm519, %vm520
      %v522 = vsel %vm521, %v513, %v518
      %v523 = vrsqrt.pop %v420
      %v524 = vmul.f32 %v523, %v420
      %v525 = vmul.f32 %v524, %v523
      %v526 = vmul.f32 0.5, %v525
      %v527 = vsub.f32 1.5, %v526
      %v528 = vmul.f32 %v523, %v527
      %vm529 = vweird.f32 %v420
      %vm530 = vweird.f32 %v523
      %vm531 = vmor %vm529, %vm530
      %v532 = vsel %vm531, %v523, %v528
      %v533 = vrsqrt.pop %v421
      %v534 = vmul.f32 %v533, %v421
      %v535 = vmul.f32 %v534, %v533
      %v536 = vmul.f32 0.5, %v535
      %v537 = vsub.f32 1.5, %v536
      %v538 = vmul.f32 %v533, %v537
      %vm539 = vweird.f32 %v421
      %vm540 = vweird.f32 %v533
      %vm541 = vmor %vm539, %vm540
      %v542 = vsel %vm541, %v533, %v538
      %v543 = vrsqrt.pop %v422
      %v544 = vmul.f32 %v543, %v422
      %v545 = vmul.f32 %v544, %v543
      %v546 = vmul.f32 0.5, %v545
      %v547 = vsub.f32 1.5, %v546
      %v548 = vmul.f32 %v543, %v547
      %vm549 = vweird.f32 %v422
      %vm550 = vweird.f32 %v543
      %vm551 = vmor %vm549, %vm550
      %v552 = vsel %vm551, %v543, %v548
      %v553 = vrsqrt.pop %v423
      %v554 = vmul.f32 %v553, %v423
      %v555 = vmul.f32 %v554, %v553
      %v556 = vmul.f32 0.5, %v555
      %v557 = vsub.f32 1.5, %v556
      %v558 = vmul.f32 %v553, %v557
      %vm559 = vweird.f32 %v423
      %vm560 = vweird.f32 %v553
      %vm561 = vmor %vm559, %vm560
      %v562 = vsel %vm561, %v553, %v558
      %v563 = vrsqrt.pop %v424
      %v564 = vmul.f32 %v563, %v424
      %v565 = vmul.f32 %v564, %v563
      %v566 = vmul.f32 0.5, %v565
      %v567 = vsub.f32 1.5, %v566
      %v568 = vmul.f32 %v563, %v567
      %vm569 = vweird.f32 %v424
      %vm570 = vweird.f32 %v563
      %vm571 = vmor %vm569, %vm570
      %v572 = vsel %vm571, %v563, %v568
      %v573 = vrsqrt.pop %v425
      %v574 = vmul.f32 %v573, %v425
      %v575 = vmul.f32 %v574, %v573
      %v576 = vmul.f32 0.5, %v575
      %v577 = vsub.f32 1.5, %v576
      %v578 = vmul.f32 %v573, %v577
      %vm579 = vweird.f32 %v425
      %vm580 = vweird.f32 %v573
      %vm581 = vmor %vm579, %vm580
      %v582 = vsel %vm581, %v573, %v578
      %v583 = vrsqrt.pop %v426
      %v584 = vmul.f32 %v583, %v426
      %v585 = vmul.f32 %v584, %v583
      %v586 = vmul.f32 0.5, %v585
      %v587 = vsub.f32 1.5, %v586
      %v588 = vmul.f32 %v583, %v587
      %vm589 = vweird.f32 %v426
      %vm590 = vweird.f32 %v583
      %vm591 = vmor %vm589, %vm590
      %v592 = vsel %vm591, %v583, %v588
      %v593 = vrsqrt.pop %v427
      %v594 = vmul.f32 %v593, %v427
      %v595 = vmul.f32 %v594, %v593
      %v596 = vmul.f32 0.5, %v595
      %v597 = vsub.f32 1.5, %v596
      %v598 = vmul.f32 %v593, %v597
      %vm599 = vweird.f32 %v427
      %vm600 = vweird.f32 %v593
      %vm601 = vmor %vm599, %vm600
      %v602 = vsel %vm601, %v593, %v598
      %v603 = vrsqrt.pop %v428
      %v604 = vmul.f32 %v603, %v428
      %v605 = vmul.f32 %v604, %v603
      %v606 = vmul.f32 0.5, %v605
      %v607 = vsub.f32 1.5, %v606
      %v608 = vmul.f32 %v603, %v607
      %vm609 = vweird.f32 %v428
      %vm610 = vweird.f32 %v603
      %vm611 = vmor %vm609, %vm610
      %v612 = vsel %vm611, %v603, %v608
      %v613 = vrsqrt.pop %v429
      %v614 = vmul.f32 %v613, %v429
      %v615 = vmul.f32 %v614, %v613
      %v616 = vmul.f32 0.5, %v615
      %v617 = vsub.f32 1.5, %v616
      %v618 = vmul.f32 %v613, %v617
      %vm619 = vweird.f32 %v429
      %vm620 = vweird.f32 %v613
      %vm621 = vmor %vm619, %vm620
      %v622 = vsel %vm621, %v613, %v618
      %v623 = vrsqrt.pop %v430
      %v624 = vmul.f32 %v623, %v430
      %v625 = vmul.f32 %v624, %v623
      %v626 = vmul.f32 0.5, %v625
      %v627 = vsub.f32 1.5, %v626
      %v628 = vmul.f32 %v623, %v627
      %vm629 = vweird.f32 %v430
      %vm630 = vweird.f32 %v623
      %vm631 = vmor %vm629, %vm630
      %v632 = vsel %vm631, %v623, %v628
      %v633 = vrsqrt.pop %v431
      %v634 = vmul.f32 %v633, %v431
      %v635 = vmul.f32 %v634, %v633
      %v636 = vmul.f32 0.5, %v635
      %v637 = vsub.f32 1.5, %v636
      %v638 = vmul.f32 %v633, %v637
      %vm639 = vweird.f32 %v431
      %vm640 = vweird.f32 %v633
      %vm641 = vmor %vm639, %vm640
      %v642 = vsel %vm641, %v633, %v638
      %v643 = vrsqrt.pop %v432
      %v644 = vmul.f32 %v643, %v432
      %v645 = vmul.f32 %v644, %v643
      %v646 = vmul.f32 0.5, %v645
      %v647 = vsub.f32 1.5, %v646
      %v648 = vmul.f32 %v643, %v647
      %vm649 = vweird.f32 %v432
      %vm650 = vweird.f32 %v643
      %vm651 = vmor %vm649, %vm650
      %v652 = vsel %vm651, %v643, %v648
      %v653 = vrsqrt.pop %v433
      %v654 = vmul.f32 %v653, %v433
      %v655 = vmul.f32 %v654, %v653
      %v656 = vmul.f32 0.5, %v655
      %v657 = vsub.f32 1.5, %v656
      %v658 = vmul.f32 %v653, %v657
      %vm659 = vweird.f32 %v433
      %vm660 = vweird.f32 %v653
      %vm661 = vmor %vm659, %vm660
      %v662 = vsel %vm661, %v653, %v658
      %v663 = vrsqrt.pop %v434
      %v664 = vmul.f32 %v663, %v434
      %v665 = vmul.f32 %v664, %v663
      %v666 = vmul.f32 0.5, %v665
      %v667 = vsub.f32 1.5, %v666
      %v668 = vmul.f32 %v663, %v667
      %vm669 = vweird.f32 %v434
      %vm670 = vweird.f32 %v663
      %vm671 = vmor %vm669, %vm670
      %v672 = vsel %vm671, %v663, %v668
      %v673 = vrsqrt.pop %v435
      %v674 = vmul.f32 %v673, %v435
      %v675 = vmul.f32 %v674, %v673
      %v676 = vmul.f32 0.5, %v675
      %v677 = vsub.f32 1.5, %v676
      %v678 = vmul.f32 %v673, %v677
      %vm679 = vweird.f32 %v435
      %vm680 = vweird.f32 %v673
      %vm681 = vmor %vm679, %vm680
      %v682 = vsel %vm681, %v673, %v678
      %v683 = vrsqrt.pop %v436
      %v684 = vmul.f32 %v683, %v436
      %v685 = vmul.f32 %v684, %v683
      %v686 = vmul.f32 0.5, %v685
      %v687 = vsub.f32 1.5, %v686
      %v688 = vmul.f32 %v683, %v687
      %vm689 = vweird.f32 %v436
      %vm690 = vweird.f32 %v683
      %vm691 = vmor %vm689, %vm690
      %v692 = vsel %vm691, %v683, %v688
      %v693 = vrsqrt.pop %v437
      %v694 = vmul.f32 %v693, %v437
      %v695 = vmul.f32 %v694, %v693
      %v696 = vmul.f32 0.5, %v695
      %v697 = vsub.f32 1.5, %v696
      %v698 = vmul.f32 %v693, %v697
      %vm699 = vweird.f32 %v437
      %vm700 = vweird.f32 %v693
      %vm701 = vmor %vm699, %vm700
      %v702 = vsel %vm701, %v693, %v698
      %v703 = vrsqrt.pop %v438
      %v704 = vmul.f32 %v703, %v438
      %v705 = vmul.f32 %v704, %v703
      %v706 = vmul.f32 0.5, %v705
      %v707 = vsub.f32 1.5, %v706
      %v708 = vmul.f32 %v703, %v707
      %vm709 = vweird.f32 %v438
      %vm710 = vweird.f32 %v703
      %vm711 = vmor %vm709, %vm710
      %v712 = vsel %vm711, %v703, %v708
      %v713 = vrsqrt.pop %v439
      %v714 = vmul.f32 %v713, %v439
      %v715 = vmul.f32 %v714, %v713
      %v716 = vmul.f32 0.5, %v715
      %v717 = vsub.f32 1.5, %v716
      %v718 = vmul.f32 %v713, %v717
      %vm719 = vweird.f32 %v439
      %vm720 = vweird.f32 %v713
      %vm721 = vmor %vm719, %vm720
      %v722 = vsel %vm721, %v713, %v718
      %v723 = vrsqrt.pop %v440
      %v724 = vmul.f32 %v723, %v440
      %v725 = vmul.f32 %v724, %v723
      %v726 = vmul.f32 0.5, %v725
      %v727 = vsub.f32 1.5, %v726
      %v728 = vmul.f32 %v723, %v727
      %vm729 = vweird.f32 %v440
      %vm730 = vweird.f32 %v723
      %vm731 = vmor %vm729, %vm730
      %v732 = vsel %vm731, %v723, %v728
      %v733 = vrsqrt.pop %v441
      %v734 = vmul.f32 %v733, %v441
      %v735 = vmul.f32 %v734, %v733
      %v736 = vmul.f32 0.5, %v735
      %v737 = vsub.f32 1.5, %v736
      %v738 = vmul.f32 %v733, %v737
      %vm739 = vweird.f32 %v441
      %vm740 = vweird.f32 %v733
      %vm741 = vmor %vm739, %vm740
      %v742 = vsel %vm741, %v733, %v738
      %v743 = vrsqrt.pop %v442
      %v744 = vmul.f32 %v743, %v442
      %v745 = vmul.f32 %v744, %v743
      %v746 = vmul.f32 0.5, %v745
      %v747 = vsub.f32 1.5, %v746
      %v748 = vmul.f32 %v743, %v747
      %vm749 = vweird.f32 %v442
      %vm750 = vweird.f32 %v743
      %vm751 = vmor %vm749, %vm750
      %v752 = vsel %vm751, %v743, %v748
      %v753 = vmul.f32 %v256, %v452
      %v754 = vmul.f32 %v257, %v462
      %v755 = vmul.f32 %v258, %v472
      %v756 = vmul.f32 %v259, %v482
      %v757 = vmul.f32 %v260, %v492
      %v758 = vmul.f32 %v261, %v502
      %v759 = vmul.f32 %v262, %v512
      %v760 = vmul.f32 %v263, %v522
      %v761 = vmul.f32 %v264, %v532
      %v762 = vmul.f32 %v265, %v542
      %v763 = vmul.f32 %v266, %v552
      %v764 = vmul.f32 %v267, %v562
      %v765 = vmul.f32 %v268, %v572
      %v766 = vmul.f32 %v269, %v582
      %v767 = vmul.f32 %v270, %v592
      %v768 = vmul.f32 %v271, %v602
      %v769 = vmul.f32 %v272, %v612
      %v770 = vmul.f32 %v273, %v622
      %v771 = vmul.f32 %v274, %v632
      %v772 = vmul.f32 %v275, %v642
      %v773 = vmul.f32 %v276, %v652
      %v774 = vmul.f32 %v277, %v662
      %v775 = vmul.f32 %v278, %v672
      %v776 = vmul.f32 %v279, %v682
      %v777 = vmul.f32 %v280, %v692
      %v778 = vmul.f32 %v281, %v702
      %v779 = vmul.f32 %v282, %v712
      %v780 = vmul.f32 %v283, %v722
      %v781 = vmul.f32 %v284, %v732
      %v782 = vmul.f32 %v285, %v742
      %v783 = vmul.f32 %v286, %v752
      %v784 = vpack.c.bf16 %v754, %v753
      %v785 = vpack.c.bf16 %v756, %v755
      %v786 = vpack.c.bf16 %v758, %v757
      %v787 = vpack.c.bf16 %v760, %v759
      %v788 = vpack.c.bf16 %v762, %v761
      %v789 = vpack.c.bf16 %v764, %v763
      %v790 = vpack.c.bf16 %v766, %v765
      %v791 = vpack.c.bf16 %v768, %v767
      %v792 = vpack.c.bf16 %v770, %v769
      %v793 = vpack.c.bf16 %v772, %v771
      %v794 = vpack.c.bf16 %v774, %v773
      %v795 = vpack.c.bf16 %v776, %v775
      %v796 = vpack.c.bf16 %v778, %v777
      %v797 = vpack.c.bf16 %v780, %v779
      %v798 = vpack.c.bf16 %v782, %v781
      %v799 = vpack.c.bf16 %v783, %v783
      %v800 = vld [vmem:[%s213] sm:$0xff]
      %v801 = vld [vmem:[%s213 + $0x8] sm:$0xff]
      %v802 = vld [vmem:[%s213 + $0x10] sm:$0xff]
      %v803 = vld [vmem:[%s213 + $0x18] sm:$0xff]
      %v808 = vunpack.c.l.b16 %v800
      %v809 = vunpack.c.h.b16 %v800
      %v810 = vunpack.c.l.b16 %v801
      %v811 = vunpack.c.h.b16 %v801
      %v812 = vunpack.c.l.b16 %v802
      %v813 = vunpack.c.h.b16 %v802
      %v814 = vunpack.c.l.b16 %v803
      %v815 = vunpack.c.h.b16 %v803
      %v816 = vpack.c.b16 %v810, %v808
      %v817 = vpack.c.b16 %v811, %v809
      %v818 = vpack.c.b16 %v814, %v812
      %v819 = vpack.c.b16 %v815, %v813
      %v825 = vsel %vm318, %v784, 0
      %v828 = vsel %vm318, %v785, 0
      %v831 = vsel %vm318, %v786, 0
      %v834 = vsel %vm318, %v787, 0
      %v837 = vsel %vm318, %v788, 0
      %v840 = vsel %vm318, %v789, 0
      %v843 = vsel %vm318, %v790, 0
      %v846 = vsel %vm318, %v791, 0
      %v849 = vsel %vm318, %v792, 0
      %v852 = vsel %vm318, %v793, 0
      %v855 = vsel %vm318, %v794, 0
      %v858 = vsel %vm318, %v795, 0
      %v861 = vsel %vm318, %v796, 0
      %v864 = vsel %vm318, %v797, 0
      %v867 = vsel %vm318, %v798, 0
      %v870 = vsel %vm318, %v799, 0
      %872 = vmatpush.bf16.msra.mxu0 0
      %873 = vmatpush.bf16.msra.mxu0 0
      %874 = vmatpush.bf16.msra.mxu0 0
      %875 = vmatpush.bf16.msra.mxu0 0
      %876 = vmatpush.bf16.msra.mxu0 0
      %877 = vmatpush.bf16.msra.mxu0 0
      %878 = vmatpush.bf16.msra.mxu0 %v818
      %879 = vmatpush.bf16.msra.mxu0 %v816
      %880 = vmatmul.bf16.gmra.mxu0 %v825
      %v881 = vpop.f32.mrf.mxu0
      %v882 = vadd.f32 0.0, %v881
      %v883 = vpop.f32.mrf.mxu0
      %v884 = vadd.f32 0.0, %v883
      %885 = vmatmul.bf16.gmra.mxu0 %v828
      %v886 = vpop.f32.mrf.mxu0
      %v887 = vadd.f32 0.0, %v886
      %v888 = vpop.f32.mrf.mxu0
      %v889 = vadd.f32 0.0, %v888
      %890 = vmatmul.bf16.gmra.mxu0 %v831
      %v891 = vpop.f32.mrf.mxu0
      %v892 = vadd.f32 0.0, %v891
      %v893 = vpop.f32.mrf.mxu0
      %v894 = vadd.f32 0.0, %v893
      %895 = vmatmul.bf16.gmra.mxu0 %v834
      %v896 = vpop.f32.mrf.mxu0
      %v897 = vadd.f32 0.0, %v896
      %v898 = vpop.f32.mrf.mxu0
      %v899 = vadd.f32 0.0, %v898
      %900 = vmatmul.bf16.gmra.mxu0 %v837
      %v901 = vpop.f32.mrf.mxu0
      %v902 = vadd.f32 0.0, %v901
      %v903 = vpop.f32.mrf.mxu0
      %v904 = vadd.f32 0.0, %v903
      %905 = vmatmul.bf16.gmra.mxu0 %v840
      %v906 = vpop.f32.mrf.mxu0
      %v907 = vadd.f32 0.0, %v906
      %v908 = vpop.f32.mrf.mxu0
      %v909 = vadd.f32 0.0, %v908
      %910 = vmatmul.bf16.gmra.mxu0 %v843
      %v911 = vpop.f32.mrf.mxu0
      %v912 = vadd.f32 0.0, %v911
      %v913 = vpop.f32.mrf.mxu0
      %v914 = vadd.f32 0.0, %v913
      %915 = vmatmul.bf16.gmra.mxu0 %v846
      %v916 = vpop.f32.mrf.mxu0
      %v917 = vadd.f32 0.0, %v916
      %v918 = vpop.f32.mrf.mxu0
      %v919 = vadd.f32 0.0, %v918
      %920 = vmatmul.bf16.gmra.mxu0 %v849
      %v921 = vpop.f32.mrf.mxu0
      %v922 = vadd.f32 0.0, %v921
      %v923 = vpop.f32.mrf.mxu0
      %v924 = vadd.f32 0.0, %v923
      %925 = vmatmul.bf16.gmra.mxu0 %v852
      %v926 = vpop.f32.mrf.mxu0
      %v927 = vadd.f32 0.0, %v926
      %v928 = vpop.f32.mrf.mxu0
      %v929 = vadd.f32 0.0, %v928
      %930 = vmatmul.bf16.gmra.mxu0 %v855
      %v931 = vpop.f32.mrf.mxu0
      %v932 = vadd.f32 0.0, %v931
      %v933 = vpop.f32.mrf.mxu0
      %v934 = vadd.f32 0.0, %v933
      %935 = vmatmul.bf16.gmra.mxu0 %v858
      %v936 = vpop.f32.mrf.mxu0
      %v937 = vadd.f32 0.0, %v936
      %v938 = vpop.f32.mrf.mxu0
      %v939 = vadd.f32 0.0, %v938
      %940 = vmatmul.bf16.gmra.mxu0 %v861
      %v941 = vpop.f32.mrf.mxu0
      %v942 = vadd.f32 0.0, %v941
      %v943 = vpop.f32.mrf.mxu0
      %v944 = vadd.f32 0.0, %v943
      %945 = vmatmul.bf16.gmra.mxu0 %v864
      %v946 = vpop.f32.mrf.mxu0
      %v947 = vadd.f32 0.0, %v946
      %v948 = vpop.f32.mrf.mxu0
      %v949 = vadd.f32 0.0, %v948
      %950 = vmatmul.bf16.gmra.mxu0 %v867
      %v951 = vpop.f32.mrf.mxu0
      %v952 = vadd.f32 0.0, %v951
      %v953 = vpop.f32.mrf.mxu0
      %v954 = vadd.f32 0.0, %v953
      %955 = vmatmul.bf16.gmra.mxu0 %v870
      %v956 = vpop.f32.mrf.mxu0
      %v957 = vadd.f32 0.0, %v956
      %v958 = vpop.f32.mrf.mxu0
      %959 = vdwg.mxu0
      %960 = vmatpush.bf16.msra.mxu0 0
      %961 = vmatpush.bf16.msra.mxu0 0
      %962 = vmatpush.bf16.msra.mxu0 0
      %963 = vmatpush.bf16.msra.mxu0 0
      %964 = vmatpush.bf16.msra.mxu0 0
      %965 = vmatpush.bf16.msra.mxu0 0
      %966 = vmatpush.bf16.msra.mxu0 %v819
      %967 = vmatpush.bf16.msra.mxu0 %v817
      %968 = vmatmul.bf16.gmra.mxu0 %v825
      %v969 = vpop.f32.mrf.mxu0
      %v970 = vadd.f32 0.0, %v969
      %v971 = vpop.f32.mrf.mxu0
      %v972 = vadd.f32 0.0, %v971
      %973 = vmatmul.bf16.gmra.mxu0 %v828
      %v974 = vpop.f32.mrf.mxu0
      %v975 = vadd.f32 0.0, %v974
      %v976 = vpop.f32.mrf.mxu0
      %v977 = vadd.f32 0.0, %v976
      %978 = vmatmul.bf16.gmra.mxu0 %v831
      %v979 = vpop.f32.mrf.mxu0
      %v980 = vadd.f32 0.0, %v979
      %v981 = vpop.f32.mrf.mxu0
      %v982 = vadd.f32 0.0, %v981
      %983 = vmatmul.bf16.gmra.mxu0 %v834
      %v984 = vpop.f32.mrf.mxu0
      %v985 = vadd.f32 0.0, %v984
      %v986 = vpop.f32.mrf.mxu0
      %v987 = vadd.f32 0.0, %v986
      %988 = vmatmul.bf16.gmra.mxu0 %v837
      %v989 = vpop.f32.mrf.mxu0
      %v990 = vadd.f32 0.0, %v989
      %v991 = vpop.f32.mrf.mxu0
      %v992 = vadd.f32 0.0, %v991
      %993 = vmatmul.bf16.gmra.mxu0 %v840
      %v994 = vpop.f32.mrf.mxu0
      %v995 = vadd.f32 0.0, %v994
      %v996 = vpop.f32.mrf.mxu0
      %v997 = vadd.f32 0.0, %v996
      %998 = vmatmul.bf16.gmra.mxu0 %v843
      %v999 = vpop.f32.mrf.mxu0
      %v1000 = vadd.f32 0.0, %v999
      %v1001 = vpop.f32.mrf.mxu0
      %v1002 = vadd.f32 0.0, %v1001
      %1003 = vmatmul.bf16.gmra.mxu0 %v846
      %v1004 = vpop.f32.mrf.mxu0
      %v1005 = vadd.f32 0.0, %v1004
      %v1006 = vpop.f32.mrf.mxu0
      %v1007 = vadd.f32 0.0, %v1006
      %1008 = vmatmul.bf16.gmra.mxu0 %v849
      %v1009 = vpop.f32.mrf.mxu0
      %v1010 = vadd.f32 0.0, %v1009
      %v1011 = vpop.f32.mrf.mxu0
      %v1012 = vadd.f32 0.0, %v1011
      %1013 = vmatmul.bf16.gmra.mxu0 %v852
      %v1014 = vpop.f32.mrf.mxu0
      %v1015 = vadd.f32 0.0, %v1014
      %v1016 = vpop.f32.mrf.mxu0
      %v1017 = vadd.f32 0.0, %v1016
      %1018 = vmatmul.bf16.gmra.mxu0 %v855
      %v1019 = vpop.f32.mrf.mxu0
      %v1020 = vadd.f32 0.0, %v1019
      %v1021 = vpop.f32.mrf.mxu0
      %v1022 = vadd.f32 0.0, %v1021
      %1023 = vmatmul.bf16.gmra.mxu0 %v858
      %v1024 = vpop.f32.mrf.mxu0
      %v1025 = vadd.f32 0.0, %v1024
      %v1026 = vpop.f32.mrf.mxu0
      %v1027 = vadd.f32 0.0, %v1026
      %1028 = vmatmul.bf16.gmra.mxu0 %v861
      %v1029 = vpop.f32.mrf.mxu0
      %v1030 = vadd.f32 0.0, %v1029
      %v1031 = vpop.f32.mrf.mxu0
      %v1032 = vadd.f32 0.0, %v1031
      %1033 = vmatmul.bf16.gmra.mxu0 %v864
      %v1034 = vpop.f32.mrf.mxu0
      %v1035 = vadd.f32 0.0, %v1034
      %v1036 = vpop.f32.mrf.mxu0
      %v1037 = vadd.f32 0.0, %v1036
      %1038 = vmatmul.bf16.gmra.mxu0 %v867
      %v1039 = vpop.f32.mrf.mxu0
      %v1040 = vadd.f32 0.0, %v1039
      %v1041 = vpop.f32.mrf.mxu0
      %v1042 = vadd.f32 0.0, %v1041
      %1043 = vmatmul.bf16.gmra.mxu0 %v870
      %v1044 = vpop.f32.mrf.mxu0
      %v1045 = vadd.f32 0.0, %v1044
      %v1046 = vpop.f32.mrf.mxu0
      %1047 = vdwg.mxu0
      %v1048 = vlaneseq
      %v1049 = vshrl.u32 %v1048, 7
      %v1050 = vadd.s32 %v1049, 8
      %v1051 = vadd.s32 %v1049, 16
      %v1052 = vadd.s32 %v1049, 24
      %v1053 = vadd.s32 %v1049, 32
      %v1054 = vadd.s32 %v1049, 40
      %v1055 = vadd.s32 %v1049, 48
      %v1056 = vadd.s32 %v1049, 56
      %v1057 = vadd.s32 %v1049, 64
      %v1058 = vadd.s32 %v1049, 72
      %v1059 = vadd.s32 %v1049, 80
      %v1060 = vadd.s32 %v1049, 88
      %v1061 = vadd.s32 %v1049, 96
      %v1062 = vadd.s32 %v1049, 104
      %v1063 = vadd.s32 %v1049, 112
      %v1064 = vadd.s32 %v1049, 120
      %v1065 = vadd.s32 %v1049, 128
      %v1066 = vadd.s32 %v1049, 136
      %v1067 = vadd.s32 %v1049, 144
      %v1068 = vadd.s32 %v1049, 152
      %v1069 = vadd.s32 %v1049, 160
      %v1070 = vadd.s32 %v1049, 168
      %v1071 = vadd.s32 %v1049, 176
      %v1072 = vadd.s32 %v1049, 184
      %v1073 = vadd.s32 %v1049, 192
      %v1074 = vadd.s32 %v1049, 200
      %v1075 = vadd.s32 %v1049, 208
      %v1076 = vadd.s32 %v1049, 216
      %v1077 = vadd.s32 %v1049, 224
      %v1078 = vadd.s32 %v1049, 232
      %v1079 = vadd.s32 %v1049, 240
      %s1080 = smul.u32 %s20, 248
      %v1081 = vstv %s1080
      %v1082 = vadd.s32 %v1049, %v1081
      %v1083 = vadd.s32 %v1050, %v1081
      %v1084 = vadd.s32 %v1051, %v1081
      %v1085 = vadd.s32 %v1052, %v1081
      %v1086 = vadd.s32 %v1053, %v1081
      %v1087 = vadd.s32 %v1054, %v1081
      %v1088 = vadd.s32 %v1055, %v1081
      %v1089 = vadd.s32 %v1056, %v1081
      %v1090 = vadd.s32 %v1057, %v1081
      %v1091 = vadd.s32 %v1058, %v1081
      %v1092 = vadd.s32 %v1059, %v1081
      %v1093 = vadd.s32 %v1060, %v1081
      %v1094 = vadd.s32 %v1061, %v1081
      %v1095 = vadd.s32 %v1062, %v1081
      %v1096 = vadd.s32 %v1063, %v1081
      %v1097 = vadd.s32 %v1064, %v1081
      %v1098 = vadd.s32 %v1065, %v1081
      %v1099 = vadd.s32 %v1066, %v1081
      %v1100 = vadd.s32 %v1067, %v1081
      %v1101 = vadd.s32 %v1068, %v1081
      %v1102 = vadd.s32 %v1069, %v1081
      %v1103 = vadd.s32 %v1070, %v1081
      %v1104 = vadd.s32 %v1071, %v1081
      %v1105 = vadd.s32 %v1072, %v1081
      %v1106 = vadd.s32 %v1073, %v1081
      %v1107 = vadd.s32 %v1074, %v1081
      %v1108 = vadd.s32 %v1075, %v1081
      %v1109 = vadd.s32 %v1076, %v1081
      %v1110 = vadd.s32 %v1077, %v1081
      %v1111 = vadd.s32 %v1078, %v1081
      %v1112 = vadd.s32 %v1079, %v1081
      %vm1113 = vcmp.lt.s32.totalorder %v1082, 247
      %vm1114 = vcmp.lt.s32.totalorder %v1083, 247
      %vm1115 = vcmp.lt.s32.totalorder %v1084, 247
      %vm1116 = vcmp.lt.s32.totalorder %v1085, 247
      %vm1117 = vcmp.lt.s32.totalorder %v1086, 247
      %vm1118 = vcmp.lt.s32.totalorder %v1087, 247
      %vm1119 = vcmp.lt.s32.totalorder %v1088, 247
      %vm1120 = vcmp.lt.s32.totalorder %v1089, 247
      %vm1121 = vcmp.lt.s32.totalorder %v1090, 247
      %vm1122 = vcmp.lt.s32.totalorder %v1091, 247
      %vm1123 = vcmp.lt.s32.totalorder %v1092, 247
      %vm1124 = vcmp.lt.s32.totalorder %v1093, 247
      %vm1125 = vcmp.lt.s32.totalorder %v1094, 247
      %vm1126 = vcmp.lt.s32.totalorder %v1095, 247
      %vm1127 = vcmp.lt.s32.totalorder %v1096, 247
      %vm1128 = vcmp.lt.s32.totalorder %v1097, 247
      %vm1129 = vcmp.lt.s32.totalorder %v1098, 247
      %vm1130 = vcmp.lt.s32.totalorder %v1099, 247
      %vm1131 = vcmp.lt.s32.totalorder %v1100, 247
      %vm1132 = vcmp.lt.s32.totalorder %v1101, 247
      %vm1133 = vcmp.lt.s32.totalorder %v1102, 247
      %vm1134 = vcmp.lt.s32.totalorder %v1103, 247
      %vm1135 = vcmp.lt.s32.totalorder %v1104, 247
      %vm1136 = vcmp.lt.s32.totalorder %v1105, 247
      %vm1137 = vcmp.lt.s32.totalorder %v1106, 247
      %vm1138 = vcmp.lt.s32.totalorder %v1107, 247
      %vm1139 = vcmp.lt.s32.totalorder %v1108, 247
      %vm1140 = vcmp.lt.s32.totalorder %v1109, 247
      %vm1141 = vcmp.lt.s32.totalorder %v1110, 247
      %vm1142 = vcmp.lt.s32.totalorder %v1111, 247
      %vm1143 = vcmp.lt.s32.totalorder %v1112, 247
      %v1144 = vsel %vm1113, %v882, -inf
      %v1145 = vsel %vm1113, %v970, -inf
      %v1146 = vsel %vm1114, %v884, -inf
      %v1147 = vsel %vm1114, %v972, -inf
      %v1148 = vsel %vm1115, %v887, -inf
      %v1149 = vsel %vm1115, %v975, -inf
      %v1150 = vsel %vm1116, %v889, -inf
      %v1151 = vsel %vm1116, %v977, -inf
      %v1152 = vsel %vm1117, %v892, -inf
      %v1153 = vsel %vm1117, %v980, -inf
      %v1154 = vsel %vm1118, %v894, -inf
      %v1155 = vsel %vm1118, %v982, -inf
      %v1156 = vsel %vm1119, %v897, -inf
      %v1157 = vsel %vm1119, %v985, -inf
      %v1158 = vsel %vm1120, %v899, -inf
      %v1159 = vsel %vm1120, %v987, -inf
      %v1160 = vsel %vm1121, %v902, -inf
      %v1161 = vsel %vm1121, %v990, -inf
      %v1162 = vsel %vm1122, %v904, -inf
      %v1163 = vsel %vm1122, %v992, -inf
      %v1164 = vsel %vm1123, %v907, -inf
      %v1165 = vsel %vm1123, %v995, -inf
      %v1166 = vsel %vm1124, %v909, -inf
      %v1167 = vsel %vm1124, %v997, -inf
      %v1168 = vsel %vm1125, %v912, -inf
      %v1169 = vsel %vm1125, %v1000, -inf
      %v1170 = vsel %vm1126, %v914, -inf
      %v1171 = vsel %vm1126, %v1002, -inf
      %v1172 = vsel %vm1127, %v917, -inf
      %v1173 = vsel %vm1127, %v1005, -inf
      %v1174 = vsel %vm1128, %v919, -inf
      %v1175 = vsel %vm1128, %v1007, -inf
      %v1176 = vsel %vm1129, %v922, -inf
      %v1177 = vsel %vm1129, %v1010, -inf
      %v1178 = vsel %vm1130, %v924, -inf
      %v1179 = vsel %vm1130, %v1012, -inf
      %v1180 = vsel %vm1131, %v927, -inf
      %v1181 = vsel %vm1131, %v1015, -inf
      %v1182 = vsel %vm1132, %v929, -inf
      %v1183 = vsel %vm1132, %v1017, -inf
      %v1184 = vsel %vm1133, %v932, -inf
      %v1185 = vsel %vm1133, %v1020, -inf
      %v1186 = vsel %vm1134, %v934, -inf
      %v1187 = vsel %vm1134, %v1022, -inf
      %v1188 = vsel %vm1135, %v937, -inf
      %v1189 = vsel %vm1135, %v1025, -inf
      %v1190 = vsel %vm1136, %v939, -inf
      %v1191 = vsel %vm1136, %v1027, -inf
      %v1192 = vsel %vm1137, %v942, -inf
      %v1193 = vsel %vm1137, %v1030, -inf
      %v1194 = vsel %vm1138, %v944, -inf
      %v1195 = vsel %vm1138, %v1032, -inf
      %v1196 = vsel %vm1139, %v947, -inf
      %v1197 = vsel %vm1139, %v1035, -inf
      %v1198 = vsel %vm1140, %v949, -inf
      %v1199 = vsel %vm1140, %v1037, -inf
      %v1200 = vsel %vm1141, %v952, -inf
      %v1201 = vsel %vm1141, %v1040, -inf
      %v1202 = vsel %vm1142, %v954, -inf
      %v1203 = vsel %vm1142, %v1042, -inf
      %v1204 = vsel %vm1143, %v957, -inf
      %v1205 = vsel %vm1143, %v1045, -inf
      %v1206 = vmax.f32 %v1144, %v1148
      %v1207 = vmax.f32 %v1146, %v1150
      %v1208 = vmax.f32 %v1206, %v1152
      %v1209 = vmax.f32 %v1207, %v1154
      %v1210 = vmax.f32 %v1208, %v1156
      %v1211 = vmax.f32 %v1209, %v1158
      %v1212 = vmax.f32 %v1210, %v1160
      %v1213 = vmax.f32 %v1211, %v1162
      %v1214 = vmax.f32 %v1212, %v1164
      %v1215 = vmax.f32 %v1213, %v1166
      %v1216 = vmax.f32 %v1214, %v1168
      %v1217 = vmax.f32 %v1215, %v1170
      %v1218 = vmax.f32 %v1216, %v1172
      %v1219 = vmax.f32 %v1217, %v1174
      %v1220 = vmax.f32 %v1218, %v1176
      %v1221 = vmax.f32 %v1219, %v1178
      %v1222 = vmax.f32 %v1220, %v1180
      %v1223 = vmax.f32 %v1221, %v1182
      %v1224 = vmax.f32 %v1222, %v1184
      %v1225 = vmax.f32 %v1223, %v1186
      %v1226 = vmax.f32 %v1224, %v1188
      %v1227 = vmax.f32 %v1225, %v1190
      %v1228 = vmax.f32 %v1226, %v1192
      %v1229 = vmax.f32 %v1227, %v1194
      %v1230 = vmax.f32 %v1228, %v1196
      %v1231 = vmax.f32 %v1229, %v1198
      %v1232 = vmax.f32 %v1230, %v1200
      %v1233 = vmax.f32 %v1231, %v1202
      %v1234 = vmax.f32 %v1232, %v1204
      %v1235 = vmax.f32 %v1234, %v1233
      %v1236 = vrot.slane %v1235, 4
      %v1237 = vmax.f32 %v1235, %v1236
      %v1238 = vrot.slane %v1237, 2
      %v1239 = vmax.f32 %v1237, %v1238
      %v1240 = vrot.slane %v1239, 1
      %v1241 = vmax.f32 %v1239, %v1240
      %v1242 = vmax.f32 %v1145, %v1149
      %v1243 = vmax.f32 %v1147, %v1151
      %v1244 = vmax.f32 %v1242, %v1153
      %v1245 = vmax.f32 %v1243, %v1155
      %v1246 = vmax.f32 %v1244, %v1157
      %v1247 = vmax.f32 %v1245, %v1159
      %v1248 = vmax.f32 %v1246, %v1161
      %v1249 = vmax.f32 %v1247, %v1163
      %v1250 = vmax.f32 %v1248, %v1165
      %v1251 = vmax.f32 %v1249, %v1167
      %v1252 = vmax.f32 %v1250, %v1169
      %v1253 = vmax.f32 %v1251, %v1171
      %v1254 = vmax.f32 %v1252, %v1173
      %v1255 = vmax.f32 %v1253, %v1175
      %v1256 = vmax.f32 %v1254, %v1177
      %v1257 = vmax.f32 %v1255, %v1179
      %v1258 = vmax.f32 %v1256, %v1181
      %v1259 = vmax.f32 %v1257, %v1183
      %v1260 = vmax.f32 %v1258, %v1185
      %v1261 = vmax.f32 %v1259, %v1187
      %v1262 = vmax.f32 %v1260, %v1189
      %v1263 = vmax.f32 %v1261, %v1191
      %v1264 = vmax.f32 %v1262, %v1193
      %v1265 = vmax.f32 %v1263, %v1195
      %v1266 = vmax.f32 %v1264, %v1197
      %v1267 = vmax.f32 %v1265, %v1199
      %v1268 = vmax.f32 %v1266, %v1201
      %v1269 = vmax.f32 %v1267, %v1203
      %v1270 = vmax.f32 %v1268, %v1205
      %v1271 = vmax.f32 %v1270, %v1269
      %v1272 = vrot.slane %v1271, 4
      %v1273 = vmax.f32 %v1271, %v1272
      %v1274 = vrot.slane %v1273, 2
      %v1275 = vmax.f32 %v1273, %v1274
      %v1276 = vrot.slane %v1275, 1
      %v1277 = vmax.f32 %v1275, %v1276
      %vm1278 = vcmp.ge.f32.partialorder %v1144, %v1241
      %vm1279 = vcmp.ge.f32.partialorder %v1145, %v1277
      %vm1280 = vcmp.ge.f32.partialorder %v1146, %v1241
      %vm1281 = vcmp.ge.f32.partialorder %v1147, %v1277
      %vm1282 = vcmp.ge.f32.partialorder %v1148, %v1241
      %vm1283 = vcmp.ge.f32.partialorder %v1149, %v1277
      %vm1284 = vcmp.ge.f32.partialorder %v1150, %v1241
      %vm1285 = vcmp.ge.f32.partialorder %v1151, %v1277
      %vm1286 = vcmp.ge.f32.partialorder %v1152, %v1241
      %vm1287 = vcmp.ge.f32.partialorder %v1153, %v1277
      %vm1288 = vcmp.ge.f32.partialorder %v1154, %v1241
      %vm1289 = vcmp.ge.f32.partialorder %v1155, %v1277
      %vm1290 = vcmp.ge.f32.partialorder %v1156, %v1241
      %vm1291 = vcmp.ge.f32.partialorder %v1157, %v1277
      %vm1292 = vcmp.ge.f32.partialorder %v1158, %v1241
      %vm1293 = vcmp.ge.f32.partialorder %v1159, %v1277
      %vm1294 = vcmp.ge.f32.partialorder %v1160, %v1241
      %vm1295 = vcmp.ge.f32.partialorder %v1161, %v1277
      %vm1296 = vcmp.ge.f32.partialorder %v1162, %v1241
      %vm1297 = vcmp.ge.f32.partialorder %v1163, %v1277
      %vm1298 = vcmp.ge.f32.partialorder %v1164, %v1241
      %vm1299 = vcmp.ge.f32.partialorder %v1165, %v1277
      %vm1300 = vcmp.ge.f32.partialorder %v1166, %v1241
      %vm1301 = vcmp.ge.f32.partialorder %v1167, %v1277
      %vm1302 = vcmp.ge.f32.partialorder %v1168, %v1241
      %vm1303 = vcmp.ge.f32.partialorder %v1169, %v1277
      %vm1304 = vcmp.ge.f32.partialorder %v1170, %v1241
      %vm1305 = vcmp.ge.f32.partialorder %v1171, %v1277
      %vm1306 = vcmp.ge.f32.partialorder %v1172, %v1241
      %vm1307 = vcmp.ge.f32.partialorder %v1173, %v1277
      %vm1308 = vcmp.ge.f32.partialorder %v1174, %v1241
      %vm1309 = vcmp.ge.f32.partialorder %v1175, %v1277
      %vm1310 = vcmp.ge.f32.partialorder %v1176, %v1241
      %vm1311 = vcmp.ge.f32.partialorder %v1177, %v1277
      %vm1312 = vcmp.ge.f32.partialorder %v1178, %v1241
      %vm1313 = vcmp.ge.f32.partialorder %v1179, %v1277
      %vm1314 = vcmp.ge.f32.partialorder %v1180, %v1241
      %vm1315 = vcmp.ge.f32.partialorder %v1181, %v1277
      %vm1316 = vcmp.ge.f32.partialorder %v1182, %v1241
      %vm1317 = vcmp.ge.f32.partialorder %v1183, %v1277
      %vm1318 = vcmp.ge.f32.partialorder %v1184, %v1241
      %vm1319 = vcmp.ge.f32.partialorder %v1185, %v1277
      %vm1320 = vcmp.ge.f32.partialorder %v1186, %v1241
      %vm1321 = vcmp.ge.f32.partialorder %v1187, %v1277
      %vm1322 = vcmp.ge.f32.partialorder %v1188, %v1241
      %vm1323 = vcmp.ge.f32.partialorder %v1189, %v1277
      %vm1324 = vcmp.ge.f32.partialorder %v1190, %v1241
      %vm1325 = vcmp.ge.f32.partialorder %v1191, %v1277
      %vm1326 = vcmp.ge.f32.partialorder %v1192, %v1241
      %vm1327 = vcmp.ge.f32.partialorder %v1193, %v1277
      %vm1328 = vcmp.ge.f32.partialorder %v1194, %v1241
      %vm1329 = vcmp.ge.f32.partialorder %v1195, %v1277
      %vm1330 = vcmp.ge.f32.partialorder %v1196, %v1241
      %vm1331 = vcmp.ge.f32.partialorder %v1197, %v1277
      %vm1332 = vcmp.ge.f32.partialorder %v1198, %v1241
      %vm1333 = vcmp.ge.f32.partialorder %v1199, %v1277
      %vm1334 = vcmp.ge.f32.partialorder %v1200, %v1241
      %vm1335 = vcmp.ge.f32.partialorder %v1201, %v1277
      %vm1336 = vcmp.ge.f32.partialorder %v1202, %v1241
      %vm1337 = vcmp.ge.f32.partialorder %v1203, %v1277
      %vm1338 = vcmp.ge.f32.partialorder %v1204, %v1241
      %vm1339 = vcmp.ge.f32.partialorder %v1205, %v1277
      %v1340 = vsel %vm1278, %v1082, 1073741824
      %v1341 = vsel %vm1279, %v1082, 1073741824
      %v1342 = vsel %vm1280, %v1083, 1073741824
      %v1343 = vsel %vm1281, %v1083, 1073741824
      %v1344 = vsel %vm1282, %v1084, 1073741824
      %v1345 = vsel %vm1283, %v1084, 1073741824
      %v1346 = vsel %vm1284, %v1085, 1073741824
      %v1347 = vsel %vm1285, %v1085, 1073741824
      %v1348 = vsel %vm1286, %v1086, 1073741824
      %v1349 = vsel %vm1287, %v1086, 1073741824
      %v1350 = vsel %vm1288, %v1087, 1073741824
      %v1351 = vsel %vm1289, %v1087, 1073741824
      %v1352 = vsel %vm1290, %v1088, 1073741824
      %v1353 = vsel %vm1291, %v1088, 1073741824
      %v1354 = vsel %vm1292, %v1089, 1073741824
      %v1355 = vsel %vm1293, %v1089, 1073741824
      %v1356 = vsel %vm1294, %v1090, 1073741824
      %v1357 = vsel %vm1295, %v1090, 1073741824
      %v1358 = vsel %vm1296, %v1091, 1073741824
      %v1359 = vsel %vm1297, %v1091, 1073741824
      %v1360 = vsel %vm1298, %v1092, 1073741824
      %v1361 = vsel %vm1299, %v1092, 1073741824
      %v1362 = vsel %vm1300, %v1093, 1073741824
      %v1363 = vsel %vm1301, %v1093, 1073741824
      %v1364 = vsel %vm1302, %v1094, 1073741824
      %v1365 = vsel %vm1303, %v1094, 1073741824
      %v1366 = vsel %vm1304, %v1095, 1073741824
      %v1367 = vsel %vm1305, %v1095, 1073741824
      %v1368 = vsel %vm1306, %v1096, 1073741824
      %v1369 = vsel %vm1307, %v1096, 1073741824
      %v1370 = vsel %vm1308, %v1097, 1073741824
      %v1371 = vsel %vm1309, %v1097, 1073741824
      %v1372 = vsel %vm1310, %v1098, 1073741824
      %v1373 = vsel %vm1311, %v1098, 1073741824
      %v1374 = vsel %vm1312, %v1099, 1073741824
      %v1375 = vsel %vm1313, %v1099, 1073741824
      %v1376 = vsel %vm1314, %v1100, 1073741824
      %v1377 = vsel %vm1315, %v1100, 1073741824
      %v1378 = vsel %vm1316, %v1101, 1073741824
      %v1379 = vsel %vm1317, %v1101, 1073741824
      %v1380 = vsel %vm1318, %v1102, 1073741824
      %v1381 = vsel %vm1319, %v1102, 1073741824
      %v1382 = vsel %vm1320, %v1103, 1073741824
      %v1383 = vsel %vm1321, %v1103, 1073741824
      %v1384 = vsel %vm1322, %v1104, 1073741824
      %v1385 = vsel %vm1323, %v1104, 1073741824
      %v1386 = vsel %vm1324, %v1105, 1073741824
      %v1387 = vsel %vm1325, %v1105, 1073741824
      %v1388 = vsel %vm1326, %v1106, 1073741824
      %v1389 = vsel %vm1327, %v1106, 1073741824
      %v1390 = vsel %vm1328, %v1107, 1073741824
      %v1391 = vsel %vm1329, %v1107, 1073741824
      %v1392 = vsel %vm1330, %v1108, 1073741824
      %v1393 = vsel %vm1331, %v1108, 1073741824
      %v1394 = vsel %vm1332, %v1109, 1073741824
      %v1395 = vsel %vm1333, %v1109, 1073741824
      %v1396 = vsel %vm1334, %v1110, 1073741824
      %v1397 = vsel %vm1335, %v1110, 1073741824
      %v1398 = vsel %vm1336, %v1111, 1073741824
      %v1399 = vsel %vm1337, %v1111, 1073741824
      %v1400 = vsel %vm1338, %v1112, 1073741824
      %v1401 = vsel %vm1339, %v1112, 1073741824
      %vm1402 = vcmp.lt.s32.totalorder %v1340, %v1344
      %v1403 = vsel %vm1402, %v1340, %v1344
      %vm1404 = vcmp.lt.s32.totalorder %v1342, %v1346
      %v1405 = vsel %vm1404, %v1342, %v1346
      %vm1406 = vcmp.lt.s32.totalorder %v1403, %v1348
      %v1407 = vsel %vm1406, %v1403, %v1348
      %vm1408 = vcmp.lt.s32.totalorder %v1405, %v1350
      %v1409 = vsel %vm1408, %v1405, %v1350
      %vm1410 = vcmp.lt.s32.totalorder %v1407, %v1352
      %v1411 = vsel %vm1410, %v1407, %v1352
      %vm1412 = vcmp.lt.s32.totalorder %v1409, %v1354
      %v1413 = vsel %vm1412, %v1409, %v1354
      %vm1414 = vcmp.lt.s32.totalorder %v1411, %v1356
      %v1415 = vsel %vm1414, %v1411, %v1356
      %vm1416 = vcmp.lt.s32.totalorder %v1413, %v1358
      %v1417 = vsel %vm1416, %v1413, %v1358
      %vm1418 = vcmp.lt.s32.totalorder %v1415, %v1360
      %v1419 = vsel %vm1418, %v1415, %v1360
      %vm1420 = vcmp.lt.s32.totalorder %v1417, %v1362
      %v1421 = vsel %vm1420, %v1417, %v1362
      %vm1422 = vcmp.lt.s32.totalorder %v1419, %v1364
      %v1423 = vsel %vm1422, %v1419, %v1364
      %vm1424 = vcmp.lt.s32.totalorder %v1421, %v1366
      %v1425 = vsel %vm1424, %v1421, %v1366
      %vm1426 = vcmp.lt.s32.totalorder %v1423, %v1368
      %v1427 = vsel %vm1426, %v1423, %v1368
      %vm1428 = vcmp.lt.s32.totalorder %v1425, %v1370
      %v1429 = vsel %vm1428, %v1425, %v1370
      %vm1430 = vcmp.lt.s32.totalorder %v1427, %v1372
      %v1431 = vsel %vm1430, %v1427, %v1372
      %vm1432 = vcmp.lt.s32.totalorder %v1429, %v1374
      %v1433 = vsel %vm1432, %v1429, %v1374
      %vm1434 = vcmp.lt.s32.totalorder %v1431, %v1376
      %v1435 = vsel %vm1434, %v1431, %v1376
      %vm1436 = vcmp.lt.s32.totalorder %v1433, %v1378
      %v1437 = vsel %vm1436, %v1433, %v1378
      %vm1438 = vcmp.lt.s32.totalorder %v1435, %v1380
      %v1439 = vsel %vm1438, %v1435, %v1380
      %vm1440 = vcmp.lt.s32.totalorder %v1437, %v1382
      %v1441 = vsel %vm1440, %v1437, %v1382
      %vm1442 = vcmp.lt.s32.totalorder %v1439, %v1384
      %v1443 = vsel %vm1442, %v1439, %v1384
      %vm1444 = vcmp.lt.s32.totalorder %v1441, %v1386
      %v1445 = vsel %vm1444, %v1441, %v1386
      %vm1446 = vcmp.lt.s32.totalorder %v1443, %v1388
      %v1447 = vsel %vm1446, %v1443, %v1388
      %vm1448 = vcmp.lt.s32.totalorder %v1445, %v1390
      %v1449 = vsel %vm1448, %v1445, %v1390
      %vm1450 = vcmp.lt.s32.totalorder %v1447, %v1392
      %v1451 = vsel %vm1450, %v1447, %v1392
      %vm1452 = vcmp.lt.s32.totalorder %v1449, %v1394
      %v1453 = vsel %vm1452, %v1449, %v1394
      %vm1454 = vcmp.lt.s32.totalorder %v1451, %v1396
      %v1455 = vsel %vm1454, %v1451, %v1396
      %vm1456 = vcmp.lt.s32.totalorder %v1453, %v1398
      %v1457 = vsel %vm1456, %v1453, %v1398
      %vm1458 = vcmp.lt.s32.totalorder %v1455, %v1400
      %v1459 = vsel %vm1458, %v1455, %v1400
      %vm1460 = vcmp.lt.s32.totalorder %v1459, %v1457
      %v1461 = vsel %vm1460, %v1459, %v1457
      %v1462 = vrot.slane %v1461, 4
      %vm1463 = vcmp.lt.s32.totalorder %v1461, %v1462
      %v1464 = vsel %vm1463, %v1461, %v1462
      %v1465 = vrot.slane %v1464, 2
      %vm1466 = vcmp.lt.s32.totalorder %v1464, %v1465
      %v1467 = vsel %vm1466, %v1464, %v1465
      %v1468 = vrot.slane %v1467, 1
      %vm1469 = vcmp.lt.s32.totalorder %v1467, %v1468
      %v1470 = vsel %vm1469, %v1467, %v1468
      %vm1471 = vcmp.lt.s32.totalorder %v1341, %v1345
      %v1472 = vsel %vm1471, %v1341, %v1345
      %vm1473 = vcmp.lt.s32.totalorder %v1343, %v1347
      %v1474 = vsel %vm1473, %v1343, %v1347
      %vm1475 = vcmp.lt.s32.totalorder %v1472, %v1349
      %v1476 = vsel %vm1475, %v1472, %v1349
      %vm1477 = vcmp.lt.s32.totalorder %v1474, %v1351
      %v1478 = vsel %vm1477, %v1474, %v1351
      %vm1479 = vcmp.lt.s32.totalorder %v1476, %v1353
      %v1480 = vsel %vm1479, %v1476, %v1353
      %vm1481 = vcmp.lt.s32.totalorder %v1478, %v1355
      %v1482 = vsel %vm1481, %v1478, %v1355
      %vm1483 = vcmp.lt.s32.totalorder %v1480, %v1357
      %v1484 = vsel %vm1483, %v1480, %v1357
      %vm1485 = vcmp.lt.s32.totalorder %v1482, %v1359
      %v1486 = vsel %vm1485, %v1482, %v1359
      %vm1487 = vcmp.lt.s32.totalorder %v1484, %v1361
      %v1488 = vsel %vm1487, %v1484, %v1361
      %vm1489 = vcmp.lt.s32.totalorder %v1486, %v1363
      %v1490 = vsel %vm1489, %v1486, %v1363
      %vm1491 = vcmp.lt.s32.totalorder %v1488, %v1365
      %v1492 = vsel %vm1491, %v1488, %v1365
      %vm1493 = vcmp.lt.s32.totalorder %v1490, %v1367
      %v1494 = vsel %vm1493, %v1490, %v1367
      %vm1495 = vcmp.lt.s32.totalorder %v1492, %v1369
      %v1496 = vsel %vm1495, %v1492, %v1369
      %vm1497 = vcmp.lt.s32.totalorder %v1494, %v1371
      %v1498 = vsel %vm1497, %v1494, %v1371
      %vm1499 = vcmp.lt.s32.totalorder %v1496, %v1373
      %v1500 = vsel %vm1499, %v1496, %v1373
      %vm1501 = vcmp.lt.s32.totalorder %v1498, %v1375
      %v1502 = vsel %vm1501, %v1498, %v1375
      %vm1503 = vcmp.lt.s32.totalorder %v1500, %v1377
      %v1504 = vsel %vm1503, %v1500, %v1377
      %vm1505 = vcmp.lt.s32.totalorder %v1502, %v1379
      %v1506 = vsel %vm1505, %v1502, %v1379
      %vm1507 = vcmp.lt.s32.totalorder %v1504, %v1381
      %v1508 = vsel %vm1507, %v1504, %v1381
      %vm1509 = vcmp.lt.s32.totalorder %v1506, %v1383
      %v1510 = vsel %vm1509, %v1506, %v1383
      %vm1511 = vcmp.lt.s32.totalorder %v1508, %v1385
      %v1512 = vsel %vm1511, %v1508, %v1385
      %vm1513 = vcmp.lt.s32.totalorder %v1510, %v1387
      %v1514 = vsel %vm1513, %v1510, %v1387
      %vm1515 = vcmp.lt.s32.totalorder %v1512, %v1389
      %v1516 = vsel %vm1515, %v1512, %v1389
      %vm1517 = vcmp.lt.s32.totalorder %v1514, %v1391
      %v1518 = vsel %vm1517, %v1514, %v1391
      %vm1519 = vcmp.lt.s32.totalorder %v1516, %v1393
      %v1520 = vsel %vm1519, %v1516, %v1393
      %vm1521 = vcmp.lt.s32.totalorder %v1518, %v1395
      %v1522 = vsel %vm1521, %v1518, %v1395
      %vm1523 = vcmp.lt.s32.totalorder %v1520, %v1397
      %v1524 = vsel %vm1523, %v1520, %v1397
      %vm1525 = vcmp.lt.s32.totalorder %v1522, %v1399
      %v1526 = vsel %vm1525, %v1522, %v1399
      %vm1527 = vcmp.lt.s32.totalorder %v1524, %v1401
      %v1528 = vsel %vm1527, %v1524, %v1401
      %vm1529 = vcmp.lt.s32.totalorder %v1528, %v1526
      %v1530 = vsel %vm1529, %v1528, %v1526
      %v1531 = vrot.slane %v1530, 4
      %vm1532 = vcmp.lt.s32.totalorder %v1530, %v1531
      %v1533 = vsel %vm1532, %v1530, %v1531
      %v1534 = vrot.slane %v1533, 2
      %vm1535 = vcmp.lt.s32.totalorder %v1533, %v1534
      %v1536 = vsel %vm1535, %v1533, %v1534
      %v1537 = vrot.slane %v1536, 1
      %vm1538 = vcmp.lt.s32.totalorder %v1536, %v1537
      %v1539 = vsel %vm1538, %v1536, %v1537
      %p1540 = scmp.eq.s32.totalorder %s20, 0
      // Predicated region
      $region29: #{_lambda_.2} parent=27 // pred_check
        %p1541 = pneg %p1540
      $region30: #{_lambda_.2} parent=27 // pred_check_branch
        %1543 = sbr.rel (%p1541) target = $region32
      $region31: #{_lambda_.2} parent=27 // pred_region
        %v1546 = vrot.slane %v1277, 7
        %vm1547 = vcmask 1040384
        %v1548 = vsel %vm1547, %v1241, %v1546
        %v1550 = vlaneseq
        %vm1551 = vcmp.ge.s32.totalorder %v1550, 0
        %vm1552 = vcmp.lt.s32.totalorder %v1550, 256
        %vm1553 = vmand %vm1551, %vm1552
        %1554 = vst.msk [vmem:[#allocation2] sm:$0x3] %vm1553, %v1548
        %v1555 = vrot.slane %v1539, 7
        %v1556 = vsel %vm1547, %v1470, %v1555
        %1557 = vst.msk [vmem:[%s222] sm:$0x3] %vm1553, %v1556
      $region32: #{_lambda_.2} parent=27 // pred_fallthru
        _
      %p1558 = scmp.gt.s32.totalorder %s20, 0
      // Predicated region
      $region33: #{_lambda_.2} parent=27 // pred_check
        %p1559 = pneg %p1558
      $region34: #{_lambda_.2} parent=27 // pred_check_branch
        %1561 = sbr.rel (%p1559) target = $region36
      $region35: #{_lambda_.2} parent=27 // pred_region
        %v1562 = vld [vmem:[#allocation2] sm:$0x3]
        %v1564 = vperm.slane %v1562, 0
        %v1565 = vperm.slane %v1562, 1
        %vm1568 = vcmp.gt.f32.partialorder %v1241, %v1564
        %vm1569 = vcmp.gt.f32.partialorder %v1277, %v1565
        %v1570 = vsel %vm1568, %v1241, %v1564
        %v1571 = vsel %vm1569, %v1277, %v1565
        %v1574 = vrot.slane %v1571, 7
        %vm1575 = vcmask 1040384
        %v1576 = vsel %vm1575, %v1570, %v1574
        %v1578 = vlaneseq
        %vm1579 = vcmp.ge.s32.totalorder %v1578, 0
        %vm1580 = vcmp.lt.s32.totalorder %v1578, 256
        %vm1581 = vmand %vm1579, %vm1580
        %1582 = vst.msk [vmem:[#allocation2] sm:$0x3] %vm1581, %v1576
        %v1583 = vld [vmem:[%s222] sm:$0x3]
        %v1584 = vperm.slane %v1583, 0
        %v1585 = vperm.slane %v1583, 1
        %v1586 = vsel %vm1568, %v1470, %v1584
        %v1587 = vsel %vm1569, %v1539, %v1585
        %v1588 = vrot.slane %v1587, 7
        %v1589 = vsel %vm1575, %v1586, %v1588
        %1590 = vst.msk [vmem:[%s222] sm:$0x3] %vm1581, %v1589
      $region36: #{_lambda_.2} parent=27 // pred_fallthru
        _
      %s1591 = smul.u32 2, %s19
      %p1592 = scmp.lt.s32.totalorder %s18, 1
      %s1593 = scalar_select %p1592, %s18, 1
      %p1594 = scmp.lt.s32.totalorder %s1591, 1
      %s1595 = scalar_select %p1594, %s1591, 1
      %s1596 = smul.addr %s1593, 2
      %s1597 = sadd.s32 %s1595, %s1596
      %s1598 = scalar_lea.vmem %s2, %s1597
      // Predicated region
      $region37: #{_lambda_.2} parent=27 // pred_check
        %p1599 = pneg %p108
      $region38: #{_lambda_.2} parent=27 // pred_check_branch
        %1601 = sbr.rel (%p1599) target = $region40
      $region39: #{_lambda_.2} parent=27 // pred_region
        %s1602 = smul.u32 2, %s19
      $region40: #{_lambda_.2} parent=27 // pred_fallthru
        _
    $region28: #{_lambda_.2} parent=5 // pred_fallthru
      _
    %p1603 = scmp.le.s32.totalorder 2, %s8
    // Predicated region
    $region41: #{_lambda_.2} parent=5 // pred_check
      %p1604 = pneg %p1603
    $region42: #{_lambda_.2} parent=5 // pred_check_branch
      %1606 = sbr.rel (%p1604) target = $region44
    $region43: #{_lambda_.2} parent=5 // pred_region
      %s1607 = ssub.s32 %s8, 2
      // Predicated region
      $region45: #{_lambda_.2} parent=43 // pred_check
        %p1608 = pneg %p114
      $region46: #{_lambda_.2} parent=43 // pred_check_branch
        %1610 = sbr.rel (%p1608) target = $region48
      $region47: #{_lambda_.2} parent=43 // pred_region
        %s1611 = smul.u32 2, %s22
        %p1612 = scmp.lt.s32.totalorder %s21, 1
        %s1613 = scalar_select %p1612, %s21, 1
        %p1614 = scmp.lt.s32.totalorder %s1611, 1
        %s1615 = scalar_select %p1614, %s1611, 1
        %s1616 = smul.addr %s1613, 2
        %s1617 = sadd.s32 %s1615, %s1616
        %s1618 = scalar_lea.vmem %s2, %s1617
      $region48: #{_lambda_.2} parent=43 // pred_fallthru
        _
    $region44: #{_lambda_.2} parent=5 // pred_fallthru
      _
  $region6: #{_lambda_.2} parent=0 // loop_footer
    %s12 = sadd.s32 1, %s8
  $region7: #{_lambda_.2} parent=0 // loop_footer_branch
    %7 = sbr.rel target = $region3
  $region8: #{_lambda_.2} parent=0 // loop_exit
    _

// kernel: _lambda_.3
$region0: #{_lambda_.3}
  #allocation0 [shape = 'u32[]', space=smem, size = 0x4, offset = 0x4, fixed_abs, tag = 'smem constant byte address 0x4 - core index']
  #allocation1 [shape = 'u32[72,128]{1,0:T(1,128)}', space=vmem, size = 0x9000, scoped, tag = 'internal scratch']
  #allocation2 [shape = 'f32[16,32]{1,0:T(8,128)}', space=vmem, size = 0x2000, scoped, tag = 'scratch operand']
  #allocation3 [shape = 'f32[16,1]{1,0:T(8,128)}', space=vmem, size = 0x2000, scoped, tag = 'scratch operand']
  %s0 = inlined_call_operand.vmem [shape: f32[2,16,32], index: 0, kind: input, shape index: {}]
  %s1 = inlined_call_operand.vmem [shape: f32[2,16,32], index: 1, kind: input, shape index: {}]
  %s2 = inlined_call_operand.vmem [shape: f32[2,16,32], index: 2, kind: output, shape index: {}]
  %s3 = sld [smem:[#allocation0]]
  $region48: #{_lambda_.3} parent=0
    _
  %s5 = ssub.s32 1, %s3
  %s6 = scalar_select 0, %s5, %s3
  loop: start=0, step=1, limit=4
  $region2: #{_lambda_.3} parent=0 // loop_pre_header
    _
  $region3: #{_lambda_.3} parent=0 // loop_header
    %s8 = sphi 0, %s12
    %p9 = scmp.ge.s32.totalorder %s8, 4
    %s18 = sphi 0, %s20
    %s21 = sphi 0, %s18
    %s22 = sphi 0, %s21
    %s38 = sphi 0, %s22
    %s44 = sphi 0, %s46
    %s47 = sphi 0, %s44
    %s48 = sphi 0, %s47
    %s64 = sphi 0, %s48
    %s70 = sphi 0, %s72
    %s73 = sphi 0, %s70
    %s74 = sphi 0, %s73
    %s90 = sphi 0, %s74
  $region4: #{_lambda_.3} parent=0 // loop_header_branch
    %11 = sbr.rel (%p9) target = $region8
  $region5: #{_lambda_.3} parent=0 // loop_body
    %s13 = ssub.s32 %s8, 1
    %s14 = ssub.s32 %s8, 2
    %s15 = sadd.s32 %s8, 1
    %s16 = ssub.s32 %s8, %s15
    %p17 = scmp.eq.s32.totalorder %s16, 0
    %s19 = sadd.s32 %s18, 1
    %s20 = scalar_select %p17, %s18, %s19
    %p23 = pneg %p17
    %p24 = scmp.eq.s32.totalorder %s8, 1
    %p25 = por %p23, %p24
    %p26 = scmp.ne.s32.totalorder %s18, %s21
    %p27 = scmp.eq.s32.totalorder %s8, 0
    %p28 = por %p26, %p27
    %p29 = scmp.ne.s32.totalorder %s18, %s21
    %p30 = scmp.eq.s32.totalorder %s13, 1
    %p31 = por %p29, %p30
    %p32 = scmp.ne.s32.totalorder %s21, %s22
    %p33 = scmp.eq.s32.totalorder %s13, 0
    %p34 = por %p32, %p33
    %p35 = scmp.ne.s32.totalorder %s21, %s22
    %p36 = scmp.eq.s32.totalorder %s14, 1
    %p37 = por %p35, %p36
    %p39 = scmp.ne.s32.totalorder %s22, %s38
    %p40 = scmp.eq.s32.totalorder %s14, 0
    %p41 = por %p39, %p40
    %s42 = ssub.s32 %s8, %s15
    %p43 = scmp.eq.s32.totalorder %s42, 0
    %s45 = sadd.s32 %s44, 1
    %s46 = scalar_select %p43, %s44, %s45
    %p49 = pneg %p43
    %p50 = scmp.eq.s32.totalorder %s8, 1
    %p51 = por %p49, %p50
    %p52 = scmp.ne.s32.totalorder %s44, %s47
    %p53 = scmp.eq.s32.totalorder %s8, 0
    %p54 = por %p52, %p53
    %p55 = scmp.ne.s32.totalorder %s44, %s47
    %p56 = scmp.eq.s32.totalorder %s13, 1
    %p57 = por %p55, %p56
    %p58 = scmp.ne.s32.totalorder %s47, %s48
    %p59 = scmp.eq.s32.totalorder %s13, 0
    %p60 = por %p58, %p59
    %p61 = scmp.ne.s32.totalorder %s47, %s48
    %p62 = scmp.eq.s32.totalorder %s14, 1
    %p63 = por %p61, %p62
    %p65 = scmp.ne.s32.totalorder %s48, %s64
    %p66 = scmp.eq.s32.totalorder %s14, 0
    %p67 = por %p65, %p66
    %s68 = ssub.s32 %s8, %s15
    %p69 = scmp.eq.s32.totalorder %s68, 0
    %s71 = sadd.s32 %s70, 1
    %s72 = scalar_select %p69, %s70, %s71
    %p75 = pneg %p69
    %p76 = scmp.eq.s32.totalorder %s8, 1
    %p77 = por %p75, %p76
    %p78 = scmp.ne.s32.totalorder %s70, %s73
    %p79 = scmp.eq.s32.totalorder %s8, 0
    %p80 = por %p78, %p79
    %p81 = scmp.ne.s32.totalorder %s70, %s73
    %p82 = scmp.eq.s32.totalorder %s13, 1
    %p83 = por %p81, %p82
    %p84 = scmp.ne.s32.totalorder %s73, %s74
    %p85 = scmp.eq.s32.totalorder %s13, 0
    %p86 = por %p84, %p85
    %p87 = scmp.ne.s32.totalorder %s73, %s74
    %p88 = scmp.eq.s32.totalorder %s14, 1
    %p89 = por %p87, %p88
    %p91 = scmp.ne.s32.totalorder %s74, %s90
    %p92 = scmp.eq.s32.totalorder %s14, 0
    %p93 = por %p91, %p92
    %p94 = scmp.le.s32.totalorder 1, %s8
    %p95 = scmp.lt.s32.totalorder %s8, 3
    %p96 = pnand %p94, %p95
    %p97 = pneg %p96
    // Predicated region
    $region9: #{_lambda_.3} parent=5 // pred_check
      _
    $region10: #{_lambda_.3} parent=5 // pred_check_branch
      %99 = sbr.rel (%p96) target = $region12
    $region11: #{_lambda_.3} parent=5 // pred_region
      %s100 = ssub.s32 %s8, 1
    $region12: #{_lambda_.3} parent=5 // pred_fallthru
      _
    %p101 = scmp.lt.s32.totalorder %s8, 2
    // Predicated region
    $region13: #{_lambda_.3} parent=5 // pred_check
      %p102 = pneg %p101
    $region14: #{_lambda_.3} parent=5 // pred_check_branch
      %104 = sbr.rel (%p102) target = $region16
    $region15: #{_lambda_.3} parent=5 // pred_region
      // Predicated region
      $region17: #{_lambda_.3} parent=15 // pred_check
        %p105 = pneg %p28
      $region18: #{_lambda_.3} parent=15 // pred_check_branch
        %107 = sbr.rel (%p105) target = $region20
      $region19: #{_lambda_.3} parent=15 // pred_region
        %p108 = scmp.lt.s32.totalorder %s8, 1
        %s109 = scalar_select %p108, %s8, 1
        %s110 = smul.addr %s109, 2
        %s111 = smul.addr %s110, 8
        %s112 = scalar_lea.vmem %s0, %s111
      $region20: #{_lambda_.3} parent=15 // pred_fallthru
        _
      // Predicated region
      $region21: #{_lambda_.3} parent=15 // pred_check
        %p113 = pneg %p54
      $region22: #{_lambda_.3} parent=15 // pred_check_branch
        %115 = sbr.rel (%p113) target = $region24
      $region23: #{_lambda_.3} parent=15 // pred_region
        %p116 = scmp.lt.s32.totalorder %s8, 1
        %s117 = scalar_select %p116, %s8, 1
        %s118 = smul.addr %s117, 2
        %s119 = smul.addr %s118, 8
        %s120 = scalar_lea.vmem %s1, %s119
      $region24: #{_lambda_.3} parent=15 // pred_fallthru
        _
    $region16: #{_lambda_.3} parent=5 // pred_fallthru
      _
    %p121 = scmp.le.s32.totalorder 1, %s8
    %p122 = scmp.lt.s32.totalorder %s8, 3
    %p123 = pnand %p121, %p122
    %p124 = pneg %p123
    // Predicated region
    $region25: #{_lambda_.3} parent=5 // pred_check
      _
    $region26: #{_lambda_.3} parent=5 // pred_check_branch
      %126 = sbr.rel (%p123) target = $region28
    $region27: #{_lambda_.3} parent=5 // pred_region
      %s127 = ssub.s32 %s8, 1
      %p128 = scmp.lt.s32.totalorder %s13, 1
      %s129 = scalar_select %p128, %s13, 1
      %s130 = smul.addr %s129, 2
      %s131 = smul.addr %s130, 8
      %s132 = scalar_lea.vmem %s0, %s131
      %p133 = pneg %p34
      %p134 = pneg %p31
      %p135 = scmp.lt.s32.totalorder %s13, 1
      %s136 = scalar_select %p135, %s13, 1
      %s137 = smul.addr %s136, 2
      %s138 = smul.addr %s137, 8
      %s139 = scalar_lea.vmem %s1, %s138
      %p140 = pneg %p60
      %p141 = pneg %p57
      %p142 = pneg %p86
      %p143 = pneg %p83
      %p144 = scmp.lt.s32.totalorder %s13, 1
      %s145 = scalar_select %p144, %s13, 1
      %s146 = smul.addr %s145, 2
      %s147 = smul.addr %s146, 8
      %s148 = scalar_lea.vmem %s2, %s147
      %p149 = scmp.lt.s32.totalorder %s13, 1
      %s150 = scalar_select %p149, %s13, 1
      %s151 = smul.addr %s150, 2
      %s152 = smul.addr %s151, 8
      %s153 = scalar_lea.vmem %s0, %s152
      %p154 = scmp.lt.s32.totalorder %s13, 1
      %s155 = scalar_select %p154, %s13, 1
      %s156 = smul.addr %s155, 2
      %s157 = smul.addr %s156, 8
      %s158 = scalar_lea.vmem %s1, %s157
      %p159 = scmp.lt.s32.totalorder %s13, 1
      %s160 = scalar_select %p159, %s13, 1
      %s161 = smul.addr %s160, 2
      %s162 = smul.addr %s161, 8
      %s163 = scalar_lea.vmem %s2, %s162
      %v164 = vld [vmem:[%s158] sm:$0xff]
      %v165 = vld [vmem:[%s158 + $0x8] sm:$0xff]
      %v166 = vld [vmem:[%s153] sm:$0xff]
      %v167 = vld [vmem:[%s153 + $0x8] sm:$0xff]
      %v168 = vmul.f32 %v164, %v164
      %v169 = vmul.f32 %v165, %v165
      %vm170 = vcmask 261120
      %v171 = vsel %vm170, %v168, 0.0
      %172 = vadd.xlane.f32.xlu0 %v171
      %v173 = vpop.xlane.xlu0 %172
      %v174 = vsel %vm170, %v169, 0.0
      %175 = vadd.xlane.f32.xlu0 %v174
      %v176 = vpop.xlane.xlu0 %175
      %v177 = vrsqrt.pop %v173
      %v178 = vmul.f32 %v177, %v173
      %v179 = vmul.f32 %v178, %v177
      %v180 = vmul.f32 0.5, %v179
      %v181 = vsub.f32 1.5, %v180
      %v182 = vmul.f32 %v177, %v181
      %v183 = vmul.f32 %v173, %v182
      %vm184 = vcmp.eq.f32.partialorder %v173, inf
      %v185 = vsel %vm184, %v173, %v183
      %vm186 = vcmp.eq.f32.partialorder %v173, 0.0
      %v187 = vand.u32 %v173, 2147483648
      %v188 = vsel %vm186, %v187, %v185
      %v189 = vrsqrt.pop %v176
      %v190 = vmul.f32 %v189, %v176
      %v191 = vmul.f32 %v190, %v189
      %v192 = vmul.f32 0.5, %v191
      %v193 = vsub.f32 1.5, %v192
      %v194 = vmul.f32 %v189, %v193
      %v195 = vmul.f32 %v176, %v194
      %vm196 = vcmp.eq.f32.partialorder %v176, inf
      %v197 = vsel %vm196, %v176, %v195
      %vm198 = vcmp.eq.f32.partialorder %v176, 0.0
      %v199 = vand.u32 %v176, 2147483648
      %v200 = vsel %vm198, %v199, %v197
      %v201 = vadd.f32 %v188, 1e-08
      %v202 = vadd.f32 %v200, 1e-08
      %v203 = vrcp.pop %v201
      %v204 = vmul.f32 %v201, %v203
      %v205 = vsub.f32 1.0, %v204
      %v206 = vmul.f32 %v203, %v205
      %v207 = vadd.f32 %v203, %v206
      %vm208 = vweird.f32 %v201
      %vm209 = vweird.f32 %v203
      %vm210 = vmor %vm208, %vm209
      %v211 = vsel %vm210, %v203, %v207
      %v212 = vand.u32 2147483647, %v201
      %vm213 = vcmp.eq.f32.partialorder %v212, 8.507059e+37
      %v214 = vand.u32 %v201, 2147483648
      %v215 = vor.u32 1.1754944e-38, %v214
      %v216 = vsel %vm213, %v215, %v211
      %v217 = vmul.f32 1.0, %v216
      %v218 = vrcp.pop %v202
      %v219 = vmul.f32 %v202, %v218
      %v220 = vsub.f32 1.0, %v219
      %v221 = vmul.f32 %v218, %v220
      %v222 = vadd.f32 %v218, %v221
      %vm223 = vweird.f32 %v202
      %vm224 = vweird.f32 %v218
      %vm225 = vmor %vm223, %vm224
      %v226 = vsel %vm225, %v218, %v222
      %v227 = vand.u32 2147483647, %v202
      %vm228 = vcmp.eq.f32.partialorder %v227, 8.507059e+37
      %v229 = vand.u32 %v202, 2147483648
      %v230 = vor.u32 1.1754944e-38, %v229
      %v231 = vsel %vm228, %v230, %v226
      %v232 = vmul.f32 1.0, %v231
      %v233 = vmul.f32 %v166, %v166
      %v234 = vmul.f32 %v167, %v167
      %v235 = vsel %vm170, %v233, 0.0
      %236 = vadd.xlane.f32.xlu0 %v235
      %v237 = vpop.xlane.xlu0 %236
      %v238 = vsel %vm170, %v234, 0.0
      %239 = vadd.xlane.f32.xlu0 %v238
      %v240 = vpop.xlane.xlu0 %239
      %v241 = vrsqrt.pop %v237
      %v242 = vmul.f32 %v241, %v237
      %v243 = vmul.f32 %v242, %v241
      %v244 = vmul.f32 0.5, %v243
      %v245 = vsub.f32 1.5, %v244
      %v246 = vmul.f32 %v241, %v245
      %v247 = vmul.f32 %v237, %v246
      %vm248 = vcmp.eq.f32.partialorder %v237, inf
      %v249 = vsel %vm248, %v237, %v247
      %vm250 = vcmp.eq.f32.partialorder %v237, 0.0
      %v251 = vand.u32 %v237, 2147483648
      %v252 = vsel %vm250, %v251, %v249
      %v253 = vrsqrt.pop %v240
      %v254 = vmul.f32 %v253, %v240
      %v255 = vmul.f32 %v254, %v253
      %v256 = vmul.f32 0.5, %v255
      %v257 = vsub.f32 1.5, %v256
      %v258 = vmul.f32 %v253, %v257
      %v259 = vmul.f32 %v240, %v258
      %vm260 = vcmp.eq.f32.partialorder %v240, inf
      %v261 = vsel %vm260, %v240, %v259
      %vm262 = vcmp.eq.f32.partialorder %v240, 0.0
      %v263 = vand.u32 %v240, 2147483648
      %v264 = vsel %vm262, %v263, %v261
      %v265 = vadd.f32 %v252, 1e-08
      %v266 = vadd.f32 %v264, 1e-08
      %v267 = vrcp.pop %v265
      %v268 = vmul.f32 %v265, %v267
      %v269 = vsub.f32 1.0, %v268
      %v270 = vmul.f32 %v267, %v269
      %v271 = vadd.f32 %v267, %v270
      %vm272 = vweird.f32 %v265
      %vm273 = vweird.f32 %v267
      %vm274 = vmor %vm272, %vm273
      %v275 = vsel %vm274, %v267, %v271
      %v276 = vand.u32 2147483647, %v265
      %vm277 = vcmp.eq.f32.partialorder %v276, 8.507059e+37
      %v278 = vand.u32 %v265, 2147483648
      %v279 = vor.u32 1.1754944e-38, %v278
      %v280 = vsel %vm277, %v279, %v275
      %v281 = vmul.f32 1.0, %v280
      %v282 = vrcp.pop %v266
      %v283 = vmul.f32 %v266, %v282
      %v284 = vsub.f32 1.0, %v283
      %v285 = vmul.f32 %v282, %v284
      %v286 = vadd.f32 %v282, %v285
      %vm287 = vweird.f32 %v266
      %vm288 = vweird.f32 %v282
      %vm289 = vmor %vm287, %vm288
      %v290 = vsel %vm289, %v282, %v286
      %v291 = vand.u32 2147483647, %v266
      %vm292 = vcmp.eq.f32.partialorder %v291, 8.507059e+37
      %v293 = vand.u32 %v266, 2147483648
      %v294 = vor.u32 1.1754944e-38, %v293
      %v295 = vsel %vm292, %v294, %v290
      %v296 = vmul.f32 1.0, %v295
      %v297 = vmul.f32 %v164, %v217
      %v298 = vmul.f32 %v165, %v232
      %299 = vst.msk [vmem:[#allocation2] sm:$0xff] %vm170, %v297
      %300 = vst.msk [vmem:[#allocation2 + $0x8] sm:$0xff] %vm170, %v298
      %v301 = vmul.f32 %v164, %v166
      %v302 = vmul.f32 %v165, %v167
      %v303 = vsel %vm170, %v301, 0.0
      %304 = vadd.xlane.f32.xlu0 %v303
      %v305 = vpop.xlane.xlu0 %304
      %v306 = vsel %vm170, %v302, 0.0
      %307 = vadd.xlane.f32.xlu0 %v306
      %v308 = vpop.xlane.xlu0 %307
      %v309 = vmul.f32 %v305, %v281
      %v310 = vmul.f32 %v308, %v296
      %vm311 = vcmask 7168
      %312 = vst.msk [vmem:[#allocation3] sm:$0xff] %vm311, %v309
      %313 = vst.msk [vmem:[#allocation3 + $0x8] sm:$0xff] %vm311, %v310
      %v314 = vld [vmem:[%s153] sm:$0x1]
      %vm315 = vcmask 253952
      %316 = vst.msk [vmem:[%s163] sm:$0x1] %vm315, %v314
      loop: start=1, step=1, limit=9
      $region29: #{_lambda_.3} parent=27 // loop_pre_header
        _
      $region30: #{_lambda_.3} parent=27 // loop_header
        %s318 = sphi 1, %s322
        %p319 = scmp.ge.s32.totalorder %s318, 9
        %v323 = vphi %v314, %v355
      $region31: #{_lambda_.3} parent=27 // loop_header_branch
        %321 = sbr.rel (%p319) target = $region35
      $region32: #{_lambda_.3} parent=27 // loop_body
        %s324 = scalar_lea.vmem [#allocation2], %s318
        %v325 = vld [vmem:[%s324] sm:$0x1]
        %s326 = scalar_lea.vmem %s153, %s318
        %v327 = vld [vmem:[%s326] sm:$0x1]
        %s328 = scalar_lea.vmem [#allocation3], %s318
        %v329 = vld [vmem:[%s328] sm:$0x1]
        %v330 = vmul.f32 %v323, %v325
        %v331 = vsel %vm315, %v330, 0.0
        %332 = vadd.xlane.f32.xlu0 %v331
        %v333 = vpop.xlane.xlu0 %332
        %v334 = vadd.f32 %v333, %v329
        %v335 = vand.u32 2147483647, %v334
        %vm336 = vcmp.lt.f32.partialorder %v335, 1e-08
        %vm337 = vcmp.lt.f32.partialorder %v334, 0.0
        %v338 = vsel %vm337, -1e-08, 1e-08
        %v339 = vsel %vm336, %v338, %v334
        %v340 = vrcp.pop %v339
        %v341 = vmul.f32 %v333, %v340
        %343 = vset.pattern.permute.xlu0 0
        %344 = vperm.xlu0 %343, %v341
        %v345 = vpop.permute.xlu0 %344
        %v347 = vmul.f32 %v345, %v323
        %v348 = vmul.f32 %v329, %v340
        %350 = vset.pattern.permute.xlu0 0
        %351 = vperm.xlu0 %350, %v348
        %v352 = vpop.permute.xlu0 %351
        %v354 = vmul.f32 %v352, %v327
        %v355 = vadd.f32 %v347, %v354
        %s356 = scalar_lea.vmem %s163, %s318
        %357 = vst.msk [vmem:[%s356] sm:$0x1] %vm315, %v355
      $region33: #{_lambda_.3} parent=27 // loop_footer
        %s322 = sadd.s32 1, %s318
      $region34: #{_lambda_.3} parent=27 // loop_footer_branch
        %317 = sbr.rel target = $region30
      $region35: #{_lambda_.3} parent=27 // loop_exit
        _
      %p358 = scmp.lt.s32.totalorder %s13, 1
      %s359 = scalar_select %p358, %s13, 1
      %s360 = smul.addr %s359, 2
      %s361 = smul.addr %s360, 8
      %s362 = scalar_lea.vmem %s2, %s361
      // Predicated region
      $region36: #{_lambda_.3} parent=27 // pred_check
        %p363 = pneg %p83
      $region37: #{_lambda_.3} parent=27 // pred_check_branch
        %365 = sbr.rel (%p363) target = $region39
      $region38: #{_lambda_.3} parent=27 // pred_region
        _
      $region39: #{_lambda_.3} parent=27 // pred_fallthru
        _
    $region28: #{_lambda_.3} parent=5 // pred_fallthru
      _
    %p366 = scmp.le.s32.totalorder 2, %s8
    // Predicated region
    $region40: #{_lambda_.3} parent=5 // pred_check
      %p367 = pneg %p366
    $region41: #{_lambda_.3} parent=5 // pred_check_branch
      %369 = sbr.rel (%p367) target = $region43
    $region42: #{_lambda_.3} parent=5 // pred_region
      %s370 = ssub.s32 %s8, 2
      // Predicated region
      $region44: #{_lambda_.3} parent=42 // pred_check
        %p371 = pneg %p89
      $region45: #{_lambda_.3} parent=42 // pred_check_branch
        %373 = sbr.rel (%p371) target = $region47
      $region46: #{_lambda_.3} parent=42 // pred_region
        %p374 = scmp.lt.s32.totalorder %s14, 1
        %s375 = scalar_select %p374, %s14, 1
        %s376 = smul.addr %s375, 2
        %s377 = smul.addr %s376, 8
        %s378 = scalar_lea.vmem %s2, %s377
      $region47: #{_lambda_.3} parent=42 // pred_fallthru
        _
    $region43: #{_lambda_.3} parent=5 // pred_fallthru
      _
  $region6: #{_lambda_.3} parent=0 // loop_footer
    %s12 = sadd.s32 1, %s8
  $region7: #{_lambda_.3} parent=0 // loop_footer_branch
    %7 = sbr.rel target = $region3
  $region8: #{_lambda_.3} parent=0 // loop_exit
    _

</llo_original>
